<compile_context>
chip_gen: v7x
topology: tpu7x:2x2x1
jax: 0.10.0
libtpu: 0.0.40
codegen_flags: <defaults>
</compile_context>

<pallas_src>
import jax
import jax.numpy as jnp
from jax.experimental import pallas as pl
from jax.experimental.pallas import tpu as pltpu


def _round_up(n, m):
    return ((n + m - 1) // m) * m


def prepare_head_params(w1, b1, bn_gamma, bn_beta, bn_mean, bn_var,
                        w2, b2, w3, b3, w4, b4, *, n_class, eps=1e-5):
    """One-time prep (do this at model init, NOT per forward call).

    Folds eval-mode BatchNorm1d into the first Linear, pads feature dims to
    MXU-friendly sizes, transposes weights to (out, in) math layout and casts
    them to bf16.  Biases stay f32.  Padded logit rows get a -1e30 bias so the
    softmax needs no in-kernel mask.
    wK: (d_in, d_out) math-layout weights (i.e. PyTorch weight.T), bK: (d_out,).
    """
    F, H1 = w1.shape
    H2, H3 = w2.shape[1], w3.shape[1]
    D0 = _round_up(F, 128)                   # 256  (contraction dim of layer 1)
    D1 = _round_up(H1, 128)                  # 400 -> 512
    D2 = _round_up(H2, 128)                  # 128
    D3 = _round_up(H3, 128)                  # 32  -> 128
    D4 = max(_round_up(n_class, 8), 8)       # class dim: sublane (8) alignment only

    # Fold eval-mode BatchNorm1d(400) into the first Linear.
    scale = bn_gamma / jnp.sqrt(bn_var + eps)
    w1f = w1 * scale[None, :]
    b1f = (b1 - bn_mean) * scale + bn_beta

    def pad_t_bf16(w, rin, cout):
        # (in, out) -> zero-pad -> transpose to (out, in) -> bf16 for the MXU.
        w = jnp.pad(w.astype(jnp.float32),
                    ((0, rin - w.shape[0]), (0, cout - w.shape[1])))
        return jnp.transpose(w).astype(jnp.bfloat16)

    def pad_col(b, rows):
        return jnp.pad(b.astype(jnp.float32), (0, rows - b.shape[0])).reshape(rows, 1)

    w1p, b1p = pad_t_bf16(w1f, D0, D1), pad_col(b1f, D1)
    w2p, b2p = pad_t_bf16(w2, D1, D2), pad_col(b2, D2)
    w3p, b3p = pad_t_bf16(w3, D2, D3), pad_col(b3, D3)
    w4p = pad_t_bf16(w4, D3, D4)
    # -1e30 on padded class rows => exp underflows to 0; no in-kernel mask.
    b4p = jnp.full((D4, 1), -1e30, dtype=jnp.float32)
    b4p = b4p.at[:n_class, 0].set(b4.astype(jnp.float32))

    return dict(w1=w1p, b1=b1p, w2=w2p, b2=b2p, w3=w3p, b3=b3p, w4=w4p, b4=b4p,
                dims=(D0, D1, D2, D3, D4), in_features=F, n_class=n_class)


def _td_head_kernel(x_ref, w1_ref, b1_ref, w2_ref, b2_ref, w3_ref, b3_ref,
                    w4_ref, b4_ref, o_ref):
    # Feature-major orientation: activations are (features, time) so the native
    # (B, F, T) input needs no transpose anywhere.  Every dot is a plain NN
    # matmul with bf16 operands and f32 accumulation on the MXU; bias/ReLU/
    # softmax math stays f32 on the VPU/EUP.
    xt = x_ref[0].astype(jnp.bfloat16)                                   # (D0, tT)

    h = jnp.dot(w1_ref[...], xt, preferred_element_type=jnp.float32)     # (D1, tT)
    h = jnp.maximum(h + b1_ref[...], 0.0)        # Linear + folded BN + ReLU
    h = jnp.dot(w2_ref[...], h.astype(jnp.bfloat16),
                preferred_element_type=jnp.float32)                      # (D2, tT)
    h = jnp.maximum(h + b2_ref[...], 0.0)
    h = jnp.dot(w3_ref[...], h.astype(jnp.bfloat16),
                preferred_element_type=jnp.float32)                      # (D3, tT)
    h = jnp.maximum(h + b3_ref[...], 0.0)
    logits = jnp.dot(w4_ref[...], h.astype(jnp.bfloat16),
                     preferred_element_type=jnp.float32) + b4_ref[...]   # (D4, tT)

    # Softmax over the class (row) axis; padded rows carry -1e30 bias -> prob 0.
    m = jnp.max(logits, axis=0, keepdims=True)
    e = jnp.exp(logits - m)
    s = jnp.sum(e, axis=0, keepdims=True)
    o_ref[0] = (e * pl.reciprocal(s, approx=True)).astype(o_ref.dtype)


def time_distributed_head(x_bft, params, *, time_tile=512):
    """TimeDistributedHead(Head) forward (eval mode).

    x_bft:  (B, F, T) bottleneck features (F == 256), time last — native layout.
    params: output of prepare_head_params().
    returns (B, T, n_class) softmax probabilities (float32).
    """
    B, F, T = x_bft.shape
    D0, D1, D2, D3, D4 = params["dims"]
    n_class = params["n_class"]
    assert F == params["in_features"], "feature dim mismatch with prepared params"

    xin = x_bft
    if F != D0:  # F == 256 for this model, so this is a no-op here.
        xin = jnp.pad(xin, ((0, 0), (0, D0 - F), (0, 0)))

    # Time tile: full T when small (block == full dim, always legal), otherwise
    # a lane-dense 512 tile (pad T on host only in that rare case).
    if T <= time_tile:
        tT, Tp = T, T
    else:
        tT = time_tile
        Tp = _round_up(T, tT)
        if Tp != T:
            xin = jnp.pad(xin, ((0, 0), (0, 0), (0, Tp - T)))

    grid = (B, Tp // tT)

    out = pl.pallas_call(
        _td_head_kernel,
        out_shape=jax.ShapeDtypeStruct((B, D4, Tp), jnp.float32),
        grid_spec=pltpu.PrefetchScalarGridSpec(
            num_scalar_prefetch=0,
            grid=grid,
            in_specs=[
                pl.BlockSpec((1, D0, tT), lambda b, t: (b, 0, t)),   # native-layout x tile
                pl.BlockSpec((D1, D0), lambda b, t: (0, 0)),         # weights/biases stay
                pl.BlockSpec((D1, 1), lambda b, t: (0, 0)),          # VMEM-resident across
                pl.BlockSpec((D2, D1), lambda b, t: (0, 0)),         # all grid steps
                pl.BlockSpec((D2, 1), lambda b, t: (0, 0)),
                pl.BlockSpec((D3, D2), lambda b, t: (0, 0)),
                pl.BlockSpec((D3, 1), lambda b, t: (0, 0)),
                pl.BlockSpec((D4, D3), lambda b, t: (0, 0)),
                pl.BlockSpec((D4, 1), lambda b, t: (0, 0)),
            ],
            out_specs=pl.BlockSpec((1, D4, tT), lambda b, t: (b, 0, t)),
        ),
        compiler_params=pltpu.CompilerParams(
            dimension_semantics=("parallel", "parallel"),   # v7x megacore sharding
        ),
    )(xin, params["w1"], params["b1"], params["w2"], params["b2"],
      params["w3"], params["b3"], params["w4"], params["b4"])

    # (B, D4, Tp) -> (B, T, n_class).  This transpose touches only B*T*n_class
    # elements (tiny) vs. the former full-input transpose+pad round-trip.
    return jnp.transpose(out[:, :n_class, :T], (0, 2, 1))


if __name__ == "__main__":
    # Small deterministic shapes consistent with the model's TimeDistributedHead
    # input: (batch=2, features=256 from the bottleneck, time=128), n_class=5.
    B, F, T, n_class = 2, 256, 128, 5
    H1, H2, H3 = 400, 128, 32
    key = jax.random.PRNGKey(0)
    ks = jax.random.split(key, 12)

    x = jax.random.normal(ks[0], (B, F, T), dtype=jnp.float32)

    w1 = 0.05 * jax.random.normal(ks[1], (F, H1), dtype=jnp.float32)
    b1 = 0.01 * jax.random.normal(ks[2], (H1,), dtype=jnp.float32)
    bn_gamma = 1.0 + 0.1 * jax.random.normal(ks[3], (H1,), dtype=jnp.float32)
    bn_beta = 0.05 * jax.random.normal(ks[4], (H1,), dtype=jnp.float32)
    bn_mean = 0.05 * jax.random.normal(ks[5], (H1,), dtype=jnp.float32)
    bn_var = 0.5 + jnp.abs(jax.random.normal(ks[6], (H1,), dtype=jnp.float32))
    w2 = 0.05 * jax.random.normal(ks[7], (H1, H2), dtype=jnp.float32)
    b2 = 0.01 * jax.random.normal(ks[8], (H2,), dtype=jnp.float32)
    w3 = 0.05 * jax.random.normal(ks[9], (H2, H3), dtype=jnp.float32)
    b3 = 0.01 * jax.random.normal(ks[10], (H3,), dtype=jnp.float32)
    w4 = 0.3 * jax.random.normal(ks[11], (H3, n_class), dtype=jnp.float32)
    b4 = jnp.zeros((n_class,), dtype=jnp.float32)

    # One-time prep (BN fold, pad, transpose, bf16 cast) — hoisted out of the
    # per-call path per the perf review.
    params = prepare_head_params(w1, b1, bn_gamma, bn_beta, bn_mean, bn_var,
                                 w2, b2, w3, b3, w4, b4, n_class=n_class)

    y = time_distributed_head(x, params)
    y = jax.block_until_ready(y)

    # Pure-JAX f32 reference of TimeDistributedHead(Head) in eval mode.
    eps = 1e-5
    xr = jnp.transpose(x, (0, 2, 1)).reshape(B * T, F)
    h = xr @ w1 + b1
    h = (h - bn_mean) / jnp.sqrt(bn_var + eps) * bn_gamma + bn_beta
    h = jnp.maximum(h, 0.0)
    h = jnp.maximum(h @ w2 + b2, 0.0)
    h = jnp.maximum(h @ w3 + b3, 0.0)
    logits = h @ w4 + b4
    ref = jax.nn.softmax(logits, axis=-1).reshape(B, T, n_class)

    assert y.shape == (B, T, n_class)
    # Tolerances reflect bf16 MXU operands + approximate reciprocal vs f32 ref.
    assert bool(jnp.allclose(jnp.sum(y, axis=-1), 1.0, atol=5e-3))
    assert bool(jnp.allclose(y, ref, atol=2e-2))

    print("KERNEL_OK")
</pallas_src>

<mosaic_0001>
module attributes {stable_mosaic.version = 11 : i64} {
  func.func @_td_head_kernel(%arg0: i32, %arg1: i32, %arg2: memref<1x256x128xf32, #tpu.memory_space<vmem>>, %arg3: memref<512x256xbf16, #tpu.memory_space<vmem>>, %arg4: memref<512x1xf32, #tpu.memory_space<vmem>>, %arg5: memref<128x512xbf16, #tpu.memory_space<vmem>>, %arg6: memref<128x1xf32, #tpu.memory_space<vmem>>, %arg7: memref<128x128xbf16, #tpu.memory_space<vmem>>, %arg8: memref<128x1xf32, #tpu.memory_space<vmem>>, %arg9: memref<8x128xbf16, #tpu.memory_space<vmem>>, %arg10: memref<8x1xf32, #tpu.memory_space<vmem>>, %arg11: memref<1x8x128xf32, #tpu.memory_space<vmem>>) attributes {dimension_semantics = [#tpu.dimension_semantics<parallel>, #tpu.dimension_semantics<parallel>], iteration_bounds = array<i64: 2, 1>, scalar_prefetch = 0 : i64, scratch_operands = 0 : i64, tpu.core_type = #tpu.core_type<tc>, window_params = [{transform_indices = @transform_0, window_bounds = array<i64: 1, 256, 128>}, {pipeline_mode = #tpu.pipeline_mode<synchronous>, transform_indices = @transform_1, window_bounds = array<i64: 512, 256>}, {pipeline_mode = #tpu.pipeline_mode<synchronous>, transform_indices = @transform_2, window_bounds = array<i64: 512, 1>}, {pipeline_mode = #tpu.pipeline_mode<synchronous>, transform_indices = @transform_3, window_bounds = array<i64: 128, 512>}, {pipeline_mode = #tpu.pipeline_mode<synchronous>, transform_indices = @transform_4, window_bounds = array<i64: 128, 1>}, {pipeline_mode = #tpu.pipeline_mode<synchronous>, transform_indices = @transform_5, window_bounds = array<i64: 128, 128>}, {pipeline_mode = #tpu.pipeline_mode<synchronous>, transform_indices = @transform_6, window_bounds = array<i64: 128, 1>}, {pipeline_mode = #tpu.pipeline_mode<synchronous>, transform_indices = @transform_7, window_bounds = array<i64: 8, 128>}, {pipeline_mode = #tpu.pipeline_mode<synchronous>, transform_indices = @transform_8, window_bounds = array<i64: 8, 1>}, {transform_indices = @transform_9, window_bounds = array<i64: 1, 8, 128>}]} {
    %c0 = arith.constant 0 : index
    %c0_0 = arith.constant 0 : index
    %c0_1 = arith.constant 0 : index
    %0 = vector.load %arg2[%c0, %c0_0, %c0_1] : memref<1x256x128xf32, #tpu.memory_space<vmem>>, vector<1x256x128xf32>
    %1 = vector.shape_cast %0 : vector<1x256x128xf32> to vector<256x128xf32>
    %2 = arith.truncf %1 : vector<256x128xf32> to vector<256x128xbf16>
    %c0_2 = arith.constant 0 : index
    %c0_3 = arith.constant 0 : index
    %3 = vector.load %arg3[%c0_2, %c0_3] : memref<512x256xbf16, #tpu.memory_space<vmem>>, vector<512x256xbf16>
    %cst = arith.constant dense<0.000000e+00> : vector<512x128xf32>
    %4 = tpu.matmul %3, %2, %cst {dimension_numbers = #tpu.dot_dimension_numbers<[1], [0], [0], [1], [0, 0, 1, 1], [], []>} : vector<512x256xbf16>, vector<256x128xbf16>, vector<512x128xf32> -> vector<512x128xf32>
    %c0_4 = arith.constant 0 : index
    %c0_5 = arith.constant 0 : index
    %5 = vector.load %arg4[%c0_4, %c0_5] : memref<512x1xf32, #tpu.memory_space<vmem>>, vector<512x1xf32>
    %6 = vector.broadcast %5 : vector<512x1xf32> to vector<512x128xf32>
    %7 = arith.addf %4, %6 : vector<512x128xf32>
    %cst_6 = arith.constant 0.000000e+00 : f32
    %8 = vector.broadcast %cst_6 : f32 to vector<512x128xf32>
    %9 = arith.maximumf %7, %8 : vector<512x128xf32>
    %c0_7 = arith.constant 0 : index
    %c0_8 = arith.constant 0 : index
    %10 = vector.load %arg5[%c0_7, %c0_8] : memref<128x512xbf16, #tpu.memory_space<vmem>>, vector<128x512xbf16>
    %11 = arith.truncf %9 : vector<512x128xf32> to vector<512x128xbf16>
    %cst_9 = arith.constant dense<0.000000e+00> : vector<128x128xf32>
    %12 = tpu.matmul %10, %11, %cst_9 {dimension_numbers = #tpu.dot_dimension_numbers<[1], [0], [0], [1], [0, 0, 1, 1], [], []>} : vector<128x512xbf16>, vector<512x128xbf16>, vector<128x128xf32> -> vector<128x128xf32>
    %c0_10 = arith.constant 0 : index
    %c0_11 = arith.constant 0 : index
    %13 = vector.load %arg6[%c0_10, %c0_11] : memref<128x1xf32, #tpu.memory_space<vmem>>, vector<128x1xf32>
    %14 = vector.broadcast %13 : vector<128x1xf32> to vector<128x128xf32>
    %15 = arith.addf %12, %14 : vector<128x128xf32>
    %cst_12 = arith.constant 0.000000e+00 : f32
    %16 = vector.broadcast %cst_12 : f32 to vector<128x128xf32>
    %17 = arith.maximumf %15, %16 : vector<128x128xf32>
    %c0_13 = arith.constant 0 : index
    %c0_14 = arith.constant 0 : index
    %18 = vector.load %arg7[%c0_13, %c0_14] : memref<128x128xbf16, #tpu.memory_space<vmem>>, vector<128x128xbf16>
    %19 = arith.truncf %17 : vector<128x128xf32> to vector<128x128xbf16>
    %cst_15 = arith.constant dense<0.000000e+00> : vector<128x128xf32>
    %20 = tpu.matmul %18, %19, %cst_15 {dimension_numbers = #tpu.dot_dimension_numbers<[1], [0], [0], [1], [0, 0, 1, 1], [], []>} : vector<128x128xbf16>, vector<128x128xbf16>, vector<128x128xf32> -> vector<128x128xf32>
    %c0_16 = arith.constant 0 : index
    %c0_17 = arith.constant 0 : index
    %21 = vector.load %arg8[%c0_16, %c0_17] : memref<128x1xf32, #tpu.memory_space<vmem>>, vector<128x1xf32>
    %22 = vector.broadcast %21 : vector<128x1xf32> to vector<128x128xf32>
    %23 = arith.addf %20, %22 : vector<128x128xf32>
    %cst_18 = arith.constant 0.000000e+00 : f32
    %24 = vector.broadcast %cst_18 : f32 to vector<128x128xf32>
    %25 = arith.maximumf %23, %24 : vector<128x128xf32>
    %c0_19 = arith.constant 0 : index
    %c0_20 = arith.constant 0 : index
    %26 = vector.load %arg9[%c0_19, %c0_20] : memref<8x128xbf16, #tpu.memory_space<vmem>>, vector<8x128xbf16>
    %27 = arith.truncf %25 : vector<128x128xf32> to vector<128x128xbf16>
    %cst_21 = arith.constant dense<0.000000e+00> : vector<8x128xf32>
    %28 = tpu.matmul %26, %27, %cst_21 {dimension_numbers = #tpu.dot_dimension_numbers<[1], [0], [0], [1], [0, 0, 1, 1], [], []>} : vector<8x128xbf16>, vector<128x128xbf16>, vector<8x128xf32> -> vector<8x128xf32>
    %c0_22 = arith.constant 0 : index
    %c0_23 = arith.constant 0 : index
    %29 = vector.load %arg10[%c0_22, %c0_23] : memref<8x1xf32, #tpu.memory_space<vmem>>, vector<8x1xf32>
    %30 = vector.broadcast %29 : vector<8x1xf32> to vector<8x128xf32>
    %31 = arith.addf %28, %30 : vector<8x128xf32>
    %cst_24 = arith.constant dense<0xFF800000> : vector<128xf32>
    %32 = vector.multi_reduction <maximumf>, %31, %cst_24 [0] : vector<8x128xf32> to vector<128xf32>
    %33 = vector.shape_cast %32 : vector<128xf32> to vector<1x128xf32>
    %34 = vector.broadcast %33 : vector<1x128xf32> to vector<8x128xf32>
    %35 = arith.subf %31, %34 : vector<8x128xf32>
    %36 = math.exp %35 : vector<8x128xf32>
    %cst_25 = arith.constant dense<0.000000e+00> : vector<128xf32>
    %37 = vector.multi_reduction <add>, %36, %cst_25 [0] : vector<8x128xf32> to vector<128xf32>
    %38 = vector.shape_cast %37 : vector<128xf32> to vector<1x128xf32>
    %39 = tpu.reciprocal %38 {approx = true} : vector<1x128xf32> -> vector<1x128xf32>
    %40 = vector.broadcast %39 : vector<1x128xf32> to vector<8x128xf32>
    %41 = arith.mulf %36, %40 : vector<8x128xf32>
    %c0_26 = arith.constant 0 : index
    %c0_27 = arith.constant 0 : index
    %c0_28 = arith.constant 0 : index
    %42 = vector.load %arg11[%c0_26, %c0_27, %c0_28] : memref<1x8x128xf32, #tpu.memory_space<vmem>>, vector<1x8x128xf32>
    %43 = vector.shape_cast %42 : vector<1x8x128xf32> to vector<8x128xf32>
    %44 = vector.shape_cast %41 : vector<8x128xf32> to vector<1x8x128xf32>
    tpu.vector_store %arg11[%c0_26, %c0_27, %c0_28], %44 {strides = array<i32>} : memref<1x8x128xf32, #tpu.memory_space<vmem>>, vector<1x8x128xf32>,
    return
  }
  func.func @transform_0(%arg0: i32, %arg1: i32) -> (i32, i32, i32) {
    %c0_i32 = arith.constant 0 : i32
    %c0_i32_0 = arith.constant 0 : i32
    return %arg0, %c0_i32, %arg1 : i32, i32, i32
  }
  func.func @transform_1(%arg0: i32, %arg1: i32) -> (i32, i32) {
    %c0_i32 = arith.constant 0 : i32
    %c0_i32_0 = arith.constant 0 : i32
    %c0_i32_1 = arith.constant 0 : i32
    return %c0_i32, %c0_i32_0 : i32, i32
  }
  func.func @transform_2(%arg0: i32, %arg1: i32) -> (i32, i32) {
    %c0_i32 = arith.constant 0 : i32
    %c0_i32_0 = arith.constant 0 : i32
    %c0_i32_1 = arith.constant 0 : i32
    return %c0_i32, %c0_i32_0 : i32, i32
  }
  func.func @transform_3(%arg0: i32, %arg1: i32) -> (i32, i32) {
    %c0_i32 = arith.constant 0 : i32
    %c0_i32_0 = arith.constant 0 : i32
    %c0_i32_1 = arith.constant 0 : i32
    return %c0_i32, %c0_i32_0 : i32, i32
  }
  func.func @transform_4(%arg0: i32, %arg1: i32) -> (i32, i32) {
    %c0_i32 = arith.constant 0 : i32
    %c0_i32_0 = arith.constant 0 : i32
    %c0_i32_1 = arith.constant 0 : i32
    return %c0_i32, %c0_i32_0 : i32, i32
  }
  func.func @transform_5(%arg0: i32, %arg1: i32) -> (i32, i32) {
    %c0_i32 = arith.constant 0 : i32
    %c0_i32_0 = arith.constant 0 : i32
    %c0_i32_1 = arith.constant 0 : i32
    return %c0_i32, %c0_i32_0 : i32, i32
  }
  func.func @transform_6(%arg0: i32, %arg1: i32) -> (i32, i32) {
    %c0_i32 = arith.constant 0 : i32
    %c0_i32_0 = arith.constant 0 : i32
    %c0_i32_1 = arith.constant 0 : i32
    return %c0_i32, %c0_i32_0 : i32, i32
  }
  func.func @transform_7(%arg0: i32, %arg1: i32) -> (i32, i32) {
    %c0_i32 = arith.constant 0 : i32
    %c0_i32_0 = arith.constant 0 : i32
    %c0_i32_1 = arith.constant 0 : i32
    return %c0_i32, %c0_i32_0 : i32, i32
  }
  func.func @transform_8(%arg0: i32, %arg1: i32) -> (i32, i32) {
    %c0_i32 = arith.constant 0 : i32
    %c0_i32_0 = arith.constant 0 : i32
    %c0_i32_1 = arith.constant 0 : i32
    return %c0_i32, %c0_i32_0 : i32, i32
  }
  func.func @transform_9(%arg0: i32, %arg1: i32) -> (i32, i32, i32) {
    %c0_i32 = arith.constant 0 : i32
    %c0_i32_0 = arith.constant 0 : i32
    return %arg0, %c0_i32, %arg1 : i32, i32, i32
  }
}

</mosaic_0001>

<llo_original>
// kernel: tpu_custom_call.1
$region0: #{tpu_custom_call.1}
  #allocation0 [shape = 'u32[]', space=smem, size = 0x4, offset = 0x4, fixed_abs, tag = 'smem constant byte address 0x4 - core index']
  #allocation1 [shape = 'u32[144,128]{1,0:T(1,128)}', space=vmem, size = 0x12000, scoped, tag = 'internal scratch']
  %s0 = inlined_call_operand.vmem [shape: f32[2,256,128], index: 0, kind: input, shape index: {}]
  %s1 = inlined_call_operand.hbm [shape: bf16[512,256], index: 1, kind: input, shape index: {}]
  %s2 = inlined_call_operand.vmem [shape: f32[512,1], index: 2, kind: input, shape index: {}]
  %s3 = inlined_call_operand.vmem [shape: bf16[128,512], index: 3, kind: input, shape index: {}]
  %s4 = inlined_call_operand.vmem [shape: f32[128,1], index: 4, kind: input, shape index: {}]
  %s5 = inlined_call_operand.hbm [shape: bf16[128,128], index: 5, kind: input, shape index: {}]
  %s6 = inlined_call_operand.vmem [shape: f32[128,1], index: 6, kind: input, shape index: {}]
  %s7 = inlined_call_operand.vmem [shape: bf16[8,128], index: 7, kind: input, shape index: {}]
  %s8 = inlined_call_operand.vmem [shape: f32[8,1], index: 8, kind: input, shape index: {}]
  %s9 = inlined_call_operand.hbm [shape: f32[2,8,128], index: 9, kind: output, shape index: {}]
  %s10 = sld [smem:[#allocation0]]
  $region77: #{tpu_custom_call.1} parent=0
    _
  %s12 = ssub.s32 1, %s10
  %s13 = scalar_select 0, %s12, %s10
  $region1: #{tpu_custom_call.1} parent=0
    #allocation2 [shape = 'u8[262144]{0}', space=vmem, size = 0x40000, scoped, tag = 'input window, operand 1, single buffered']
    #allocation3 [shape = 's32[2]{0}', space=sflag, size = 0x8, scoped, tag = 'scoped memory for tpu_custom_call.1']
    #allocation4 [shape = 's32[2]{0}', space=sflag, size = 0x8, scoped, tag = 'scoped memory for tpu_custom_call.1']
    #allocation5 [shape = 'u8[32768]{0}', space=vmem, size = 0x8000, scoped, tag = 'input window, operand 5, single buffered']
    #allocation6 [shape = 's32[1]{0}', space=sflag, size = 0x4, scoped, tag = 'scoped memory for tpu_custom_call.1']
    #allocation7 [shape = 'u8[8192]{0}', space=vmem, size = 0x2000, scoped, tag = 'output window, operand 0']
    %14 = vsyncpa [#allocation3], 0
    %15 = vsyncpa [#allocation6], 0
    %16 = vsyncpa [#allocation4], 0
    %s17 = scalar_lea.sflag [#allocation4], 1
    %18 = vsyncpa %s17, 0
    loop: start=0, step=1, limit=4
    $region2: #{tpu_custom_call.1} parent=1 // loop_pre_header
      _
    $region3: #{tpu_custom_call.1} parent=1 // loop_header
      %s20 = sphi 0, %s24
      %p21 = scmp.ge.s32.totalorder %s20, 4
      %s27 = sphi 0, %s39
      %s28 = sphi 0, %s35
      %s29 = sphi 0, %s27
      %s30 = sphi 0, %s28
      %s31 = sphi 0, %s29
      %s32 = sphi 0, %s30
      %s44 = sphi 0, %s46
      %s47 = sphi 0, %s44
      %s48 = sphi 0, %s47
      %s64 = sphi 0, %s48
      %s68 = sphi 0, %s68
      %s70 = sphi 0, %s68
      %s71 = sphi 0, %s70
      %s85 = sphi 0, %s71
      %s89 = sphi 0, %s89
      %s91 = sphi 0, %s89
      %s92 = sphi 0, %s91
      %s106 = sphi 0, %s92
      %s110 = sphi 0, %s110
      %s112 = sphi 0, %s110
      %s113 = sphi 0, %s112
      %s127 = sphi 0, %s113
      %s131 = sphi 0, %s131
      %s133 = sphi 0, %s131
      %s134 = sphi 0, %s133
      %s148 = sphi 0, %s134
      %s152 = sphi 0, %s152
      %s154 = sphi 0, %s152
      %s155 = sphi 0, %s154
      %s169 = sphi 0, %s155
      %s173 = sphi 0, %s173
      %s175 = sphi 0, %s173
      %s176 = sphi 0, %s175
      %s190 = sphi 0, %s176
      %s194 = sphi 0, %s194
      %s196 = sphi 0, %s194
      %s197 = sphi 0, %s196
      %s211 = sphi 0, %s197
      %s215 = sphi 0, %s215
      %s217 = sphi 0, %s215
      %s218 = sphi 0, %s217
      %s232 = sphi 0, %s218
      %s240 = sphi 0, %s242
      %s243 = sphi 0, %s240
      %s244 = sphi 0, %s243
      %s260 = sphi 0, %s244
    $region4: #{tpu_custom_call.1} parent=1 // loop_header_branch
      %23 = sbr.rel (%p21) target = $region8
    $region5: #{tpu_custom_call.1} parent=1 // loop_body
      %s25 = ssub.s32 %s20, 1
      %s26 = ssub.s32 %s20, 2
      %s33 = sadd.s32 1, %s28
      %p34 = scmp.ge.s32.totalorder %s33, 1
      %s35 = scalar_select %p34, 0, %s33
      %s36 = sadd.s32 1, %s27
      %s37 = scalar_select %p34, %s36, %s27
      %p38 = scmp.ge.s32.totalorder %s37, 2
      %s39 = scalar_select %p38, 0, %s37
      %s40 = ssub.s32 %s27, %s39
      %s41 = ssub.s32 %s28, %s35
      %s42 = sor.u32 %s40, %s41
      %p43 = scmp.eq.s32.totalorder %s42, 0
      %s45 = sadd.s32 %s44, 1
      %s46 = scalar_select %p43, %s44, %s45
      %p49 = pneg %p43
      %p50 = scmp.eq.s32.totalorder %s20, 1
      %p51 = por %p49, %p50
      %p52 = scmp.ne.s32.totalorder %s44, %s47
      %p53 = scmp.eq.s32.totalorder %s20, 0
      %p54 = por %p52, %p53
      %p55 = scmp.ne.s32.totalorder %s44, %s47
      %p56 = scmp.eq.s32.totalorder %s25, 1
      %p57 = por %p55, %p56
      %p58 = scmp.ne.s32.totalorder %s47, %s48
      %p59 = scmp.eq.s32.totalorder %s25, 0
      %p60 = por %p58, %p59
      %p61 = scmp.ne.s32.totalorder %s47, %s48
      %p62 = scmp.eq.s32.totalorder %s26, 1
      %p63 = por %p61, %p62
      %p65 = scmp.ne.s32.totalorder %s48, %s64
      %p66 = scmp.eq.s32.totalorder %s26, 0
      %p67 = por %p65, %p66
      %s69 = sadd.s32 %s68, 1
      %p72 = scmp.eq.s32.totalorder %s20, 1
      %p73 = scmp.ne.s32.totalorder %s68, %s70
      %p74 = scmp.eq.s32.totalorder %s20, 0
      %p75 = por %p73, %p74
      %p76 = scmp.ne.s32.totalorder %s68, %s70
      %p77 = scmp.eq.s32.totalorder %s25, 1
      %p78 = por %p76, %p77
      %p79 = scmp.ne.s32.totalorder %s70, %s71
      %p80 = scmp.eq.s32.totalorder %s25, 0
      %p81 = por %p79, %p80
      %p82 = scmp.ne.s32.totalorder %s70, %s71
      %p83 = scmp.eq.s32.totalorder %s26, 1
      %p84 = por %p82, %p83
      %p86 = scmp.ne.s32.totalorder %s71, %s85
      %p87 = scmp.eq.s32.totalorder %s26, 0
      %p88 = por %p86, %p87
      %s90 = sadd.s32 %s89, 1
      %p93 = scmp.eq.s32.totalorder %s20, 1
      %p94 = scmp.ne.s32.totalorder %s89, %s91
      %p95 = scmp.eq.s32.totalorder %s20, 0
      %p96 = por %p94, %p95
      %p97 = scmp.ne.s32.totalorder %s89, %s91
      %p98 = scmp.eq.s32.totalorder %s25, 1
      %p99 = por %p97, %p98
      %p100 = scmp.ne.s32.totalorder %s91, %s92
      %p101 = scmp.eq.s32.totalorder %s25, 0
      %p102 = por %p100, %p101
      %p103 = scmp.ne.s32.totalorder %s91, %s92
      %p104 = scmp.eq.s32.totalorder %s26, 1
      %p105 = por %p103, %p104
      %p107 = scmp.ne.s32.totalorder %s92, %s106
      %p108 = scmp.eq.s32.totalorder %s26, 0
      %p109 = por %p107, %p108
      %s111 = sadd.s32 %s110, 1
      %p114 = scmp.eq.s32.totalorder %s20, 1
      %p115 = scmp.ne.s32.totalorder %s110, %s112
      %p116 = scmp.eq.s32.totalorder %s20, 0
      %p117 = por %p115, %p116
      %p118 = scmp.ne.s32.totalorder %s110, %s112
      %p119 = scmp.eq.s32.totalorder %s25, 1
      %p120 = por %p118, %p119
      %p121 = scmp.ne.s32.totalorder %s112, %s113
      %p122 = scmp.eq.s32.totalorder %s25, 0
      %p123 = por %p121, %p122
      %p124 = scmp.ne.s32.totalorder %s112, %s113
      %p125 = scmp.eq.s32.totalorder %s26, 1
      %p126 = por %p124, %p125
      %p128 = scmp.ne.s32.totalorder %s113, %s127
      %p129 = scmp.eq.s32.totalorder %s26, 0
      %p130 = por %p128, %p129
      %s132 = sadd.s32 %s131, 1
      %p135 = scmp.eq.s32.totalorder %s20, 1
      %p136 = scmp.ne.s32.totalorder %s131, %s133
      %p137 = scmp.eq.s32.totalorder %s20, 0
      %p138 = por %p136, %p137
      %p139 = scmp.ne.s32.totalorder %s131, %s133
      %p140 = scmp.eq.s32.totalorder %s25, 1
      %p141 = por %p139, %p140
      %p142 = scmp.ne.s32.totalorder %s133, %s134
      %p143 = scmp.eq.s32.totalorder %s25, 0
      %p144 = por %p142, %p143
      %p145 = scmp.ne.s32.totalorder %s133, %s134
      %p146 = scmp.eq.s32.totalorder %s26, 1
      %p147 = por %p145, %p146
      %p149 = scmp.ne.s32.totalorder %s134, %s148
      %p150 = scmp.eq.s32.totalorder %s26, 0
      %p151 = por %p149, %p150
      %s153 = sadd.s32 %s152, 1
      %p156 = scmp.eq.s32.totalorder %s20, 1
      %p157 = scmp.ne.s32.totalorder %s152, %s154
      %p158 = scmp.eq.s32.totalorder %s20, 0
      %p159 = por %p157, %p158
      %p160 = scmp.ne.s32.totalorder %s152, %s154
      %p161 = scmp.eq.s32.totalorder %s25, 1
      %p162 = por %p160, %p161
      %p163 = scmp.ne.s32.totalorder %s154, %s155
      %p164 = scmp.eq.s32.totalorder %s25, 0
      %p165 = por %p163, %p164
      %p166 = scmp.ne.s32.totalorder %s154, %s155
      %p167 = scmp.eq.s32.totalorder %s26, 1
      %p168 = por %p166, %p167
      %p170 = scmp.ne.s32.totalorder %s155, %s169
      %p171 = scmp.eq.s32.totalorder %s26, 0
      %p172 = por %p170, %p171
      %s174 = sadd.s32 %s173, 1
      %p177 = scmp.eq.s32.totalorder %s20, 1
      %p178 = scmp.ne.s32.totalorder %s173, %s175
      %p179 = scmp.eq.s32.totalorder %s20, 0
      %p180 = por %p178, %p179
      %p181 = scmp.ne.s32.totalorder %s173, %s175
      %p182 = scmp.eq.s32.totalorder %s25, 1
      %p183 = por %p181, %p182
      %p184 = scmp.ne.s32.totalorder %s175, %s176
      %p185 = scmp.eq.s32.totalorder %s25, 0
      %p186 = por %p184, %p185
      %p187 = scmp.ne.s32.totalorder %s175, %s176
      %p188 = scmp.eq.s32.totalorder %s26, 1
      %p189 = por %p187, %p188
      %p191 = scmp.ne.s32.totalorder %s176, %s190
      %p192 = scmp.eq.s32.totalorder %s26, 0
      %p193 = por %p191, %p192
      %s195 = sadd.s32 %s194, 1
      %p198 = scmp.eq.s32.totalorder %s20, 1
      %p199 = scmp.ne.s32.totalorder %s194, %s196
      %p200 = scmp.eq.s32.totalorder %s20, 0
      %p201 = por %p199, %p200
      %p202 = scmp.ne.s32.totalorder %s194, %s196
      %p203 = scmp.eq.s32.totalorder %s25, 1
      %p204 = por %p202, %p203
      %p205 = scmp.ne.s32.totalorder %s196, %s197
      %p206 = scmp.eq.s32.totalorder %s25, 0
      %p207 = por %p205, %p206
      %p208 = scmp.ne.s32.totalorder %s196, %s197
      %p209 = scmp.eq.s32.totalorder %s26, 1
      %p210 = por %p208, %p209
      %p212 = scmp.ne.s32.totalorder %s197, %s211
      %p213 = scmp.eq.s32.totalorder %s26, 0
      %p214 = por %p212, %p213
      %s216 = sadd.s32 %s215, 1
      %p219 = scmp.eq.s32.totalorder %s20, 1
      %p220 = scmp.ne.s32.totalorder %s215, %s217
      %p221 = scmp.eq.s32.totalorder %s20, 0
      %p222 = por %p220, %p221
      %p223 = scmp.ne.s32.totalorder %s215, %s217
      %p224 = scmp.eq.s32.totalorder %s25, 1
      %p225 = por %p223, %p224
      %p226 = scmp.ne.s32.totalorder %s217, %s218
      %p227 = scmp.eq.s32.totalorder %s25, 0
      %p228 = por %p226, %p227
      %p229 = scmp.ne.s32.totalorder %s217, %s218
      %p230 = scmp.eq.s32.totalorder %s26, 1
      %p231 = por %p229, %p230
      %p233 = scmp.ne.s32.totalorder %s218, %s232
      %p234 = scmp.eq.s32.totalorder %s26, 0
      %p235 = por %p233, %p234
      %s236 = ssub.s32 %s27, %s39
      %s237 = ssub.s32 %s28, %s35
      %s238 = sor.u32 %s236, %s237
      %p239 = scmp.eq.s32.totalorder %s238, 0
      %s241 = sadd.s32 %s240, 1
      %s242 = scalar_select %p239, %s240, %s241
      %p245 = pneg %p239
      %p246 = scmp.eq.s32.totalorder %s20, 1
      %p247 = por %p245, %p246
      %p248 = scmp.ne.s32.totalorder %s240, %s243
      %p249 = scmp.eq.s32.totalorder %s20, 0
      %p250 = por %p248, %p249
      %p251 = scmp.ne.s32.totalorder %s240, %s243
      %p252 = scmp.eq.s32.totalorder %s25, 1
      %p253 = por %p251, %p252
      %p254 = scmp.ne.s32.totalorder %s243, %s244
      %p255 = scmp.eq.s32.totalorder %s25, 0
      %p256 = por %p254, %p255
      %p257 = scmp.ne.s32.totalorder %s243, %s244
      %p258 = scmp.eq.s32.totalorder %s26, 1
      %p259 = por %p257, %p258
      %p261 = scmp.ne.s32.totalorder %s244, %s260
      %p262 = scmp.eq.s32.totalorder %s26, 0
      %p263 = por %p261, %p262
      %p264 = scmp.le.s32.totalorder 1, %s20
      %p265 = scmp.lt.s32.totalorder %s20, 3
      %p266 = pnand %p264, %p265
      %p267 = pneg %p266
      // Predicated region
      $region9: #{tpu_custom_call.1} parent=5 // pred_check
        _
      $region10: #{tpu_custom_call.1} parent=5 // pred_check_branch
        %269 = sbr.rel (%p266) target = $region12
      $region11: #{tpu_custom_call.1} parent=5 // pred_region
        %s270 = ssub.s32 %s20, 1
        // Predicated region
        $region13: #{tpu_custom_call.1} parent=11 // pred_check
          %p271 = pneg %p81
        $region14: #{tpu_custom_call.1} parent=11 // pred_check_branch
          %273 = sbr.rel (%p271) target = $region16
        $region15: #{tpu_custom_call.1} parent=11 // pred_region
          %s275 = ssub.s32 8192, 8192
          %276 = vsyncadd [#allocation3], %s275
          %s277 = sshll.u32 [#allocation2], 4
          %s278 = int_to_ptr.vmem [resolvable:$true] %s277
          %283 = dma.hbm_to_vmem [thread:$0]  %s1, 8192, %s278, [#allocation3], 128, 128, 8
        $region16: #{tpu_custom_call.1} parent=11 // pred_fallthru
          _
        // Predicated region
        $region17: #{tpu_custom_call.1} parent=11 // pred_check
          %p284 = pneg %p102
        $region18: #{tpu_custom_call.1} parent=11 // pred_check_branch
          %286 = sbr.rel (%p284) target = $region20
        $region19: #{tpu_custom_call.1} parent=11 // pred_region
          _
        $region20: #{tpu_custom_call.1} parent=11 // pred_fallthru
          _
        // Predicated region
        $region21: #{tpu_custom_call.1} parent=11 // pred_check
          %p287 = pneg %p123
        $region22: #{tpu_custom_call.1} parent=11 // pred_check_branch
          %289 = sbr.rel (%p287) target = $region24
        $region23: #{tpu_custom_call.1} parent=11 // pred_region
          _
        $region24: #{tpu_custom_call.1} parent=11 // pred_fallthru
          _
        // Predicated region
        $region25: #{tpu_custom_call.1} parent=11 // pred_check
          %p290 = pneg %p144
        $region26: #{tpu_custom_call.1} parent=11 // pred_check_branch
          %292 = sbr.rel (%p290) target = $region28
        $region27: #{tpu_custom_call.1} parent=11 // pred_region
          _
        $region28: #{tpu_custom_call.1} parent=11 // pred_fallthru
          _
        // Predicated region
        $region29: #{tpu_custom_call.1} parent=11 // pred_check
          %p293 = pneg %p165
        $region30: #{tpu_custom_call.1} parent=11 // pred_check_branch
          %295 = sbr.rel (%p293) target = $region32
        $region31: #{tpu_custom_call.1} parent=11 // pred_region
          %s297 = ssub.s32 1024, 1024
          %298 = vsyncadd [#allocation6], %s297
          %s299 = sshll.u32 [#allocation5], 4
          %s300 = int_to_ptr.vmem [resolvable:$true] %s299
          %305 = dma.hbm_to_vmem [thread:$0]  %s5, 1024, %s300, [#allocation6], 64, 64, 4
        $region32: #{tpu_custom_call.1} parent=11 // pred_fallthru
          _
        // Predicated region
        $region33: #{tpu_custom_call.1} parent=11 // pred_check
          %p306 = pneg %p186
        $region34: #{tpu_custom_call.1} parent=11 // pred_check_branch
          %308 = sbr.rel (%p306) target = $region36
        $region35: #{tpu_custom_call.1} parent=11 // pred_region
          _
        $region36: #{tpu_custom_call.1} parent=11 // pred_fallthru
          _
        // Predicated region
        $region37: #{tpu_custom_call.1} parent=11 // pred_check
          %p309 = pneg %p207
        $region38: #{tpu_custom_call.1} parent=11 // pred_check_branch
          %311 = sbr.rel (%p309) target = $region40
        $region39: #{tpu_custom_call.1} parent=11 // pred_region
          _
        $region40: #{tpu_custom_call.1} parent=11 // pred_fallthru
          _
        // Predicated region
        $region41: #{tpu_custom_call.1} parent=11 // pred_check
          %p312 = pneg %p228
        $region42: #{tpu_custom_call.1} parent=11 // pred_check_branch
          %314 = sbr.rel (%p312) target = $region44
        $region43: #{tpu_custom_call.1} parent=11 // pred_region
          _
        $region44: #{tpu_custom_call.1} parent=11 // pred_fallthru
          _
      $region12: #{tpu_custom_call.1} parent=5 // pred_fallthru
        _
      %p315 = scmp.lt.s32.totalorder %s20, 2
      // Predicated region
      $region45: #{tpu_custom_call.1} parent=5 // pred_check
        %p316 = pneg %p315
      $region46: #{tpu_custom_call.1} parent=5 // pred_check_branch
        %318 = sbr.rel (%p316) target = $region48
      $region47: #{tpu_custom_call.1} parent=5 // pred_region
        // Predicated region
        $region49: #{tpu_custom_call.1} parent=47 // pred_check
          %p319 = pneg %p54
        $region50: #{tpu_custom_call.1} parent=47 // pred_check_branch
          %321 = sbr.rel (%p319) target = $region52
        $region51: #{tpu_custom_call.1} parent=47 // pred_region
          %p322 = scmp.lt.s32.totalorder %s27, 1
          %s323 = scalar_select %p322, %s27, 1
          %p324 = scmp.lt.s32.totalorder %s28, 0
          %s325 = scalar_select %p324, %s28, 0
          %s326 = smul.addr %s323, 32
          %s327 = sadd.s32 %s325, %s326
          %s328 = smul.addr %s327, 8
          %s329 = scalar_lea.vmem %s0, %s328
        $region52: #{tpu_custom_call.1} parent=47 // pred_fallthru
          _
      $region48: #{tpu_custom_call.1} parent=5 // pred_fallthru
        _
      %p330 = scmp.le.s32.totalorder 1, %s20
      %p331 = scmp.lt.s32.totalorder %s20, 3
      %p332 = pnand %p330, %p331
      %p333 = pneg %p332
      // Predicated region
      $region53: #{tpu_custom_call.1} parent=5 // pred_check
        _
      $region54: #{tpu_custom_call.1} parent=5 // pred_check_branch
        %335 = sbr.rel (%p332) target = $region56
      $region55: #{tpu_custom_call.1} parent=5 // pred_region
        %s336 = ssub.s32 %s20, 1
        // Predicated region
        $region57: #{tpu_custom_call.1} parent=55 // pred_check
          %p337 = pneg %p81
        $region58: #{tpu_custom_call.1} parent=55 // pred_check_branch
          %339 = sbr.rel (%p337) target = $region60
        $region59: #{tpu_custom_call.1} parent=55 // pred_region
          %340 = dma.done [#allocation3], 8192
        $region60: #{tpu_custom_call.1} parent=55 // pred_fallthru
          _
        // Predicated region
        $region61: #{tpu_custom_call.1} parent=55 // pred_check
          %p341 = pneg %p165
        $region62: #{tpu_custom_call.1} parent=55 // pred_check_branch
          %343 = sbr.rel (%p341) target = $region64
        $region63: #{tpu_custom_call.1} parent=55 // pred_region
          %344 = dma.done [#allocation6], 1024
        $region64: #{tpu_custom_call.1} parent=55 // pred_fallthru
          _
        %p345 = scmp.lt.s32.totalorder %s29, 1
        %s346 = scalar_select %p345, %s29, 1
        %p347 = scmp.lt.s32.totalorder %s30, 0
        %s348 = scalar_select %p347, %s30, 0
        %s349 = smul.addr %s346, 32
        %s350 = sadd.s32 %s348, %s349
        %s351 = smul.addr %s350, 8
        %s352 = scalar_lea.vmem %s0, %s351
        %p353 = pneg %p60
        %p354 = pneg %p57
        %p355 = pneg %p81
        %p356 = pneg %p78
        %p357 = pneg %p102
        %p358 = pneg %p99
        %p359 = pneg %p123
        %p360 = pneg %p120
        %p361 = pneg %p144
        %p362 = pneg %p141
        %p363 = pneg %p165
        %p364 = pneg %p162
        %p365 = pneg %p186
        %p366 = pneg %p183
        %p367 = pneg %p207
        %p368 = pneg %p204
        %p369 = pneg %p228
        %p370 = pneg %p225
        %p371 = pneg %p256
        %p372 = pneg %p253
        %s373 = sand.u32 %s243, 1
        %s374 = scalar_lea.sflag [#allocation4], %s373
        %s375 = sand.u32 %s243, 1
        %s376 = smul.addr %s375, 8
        %s377 = scalar_lea.vmem [#allocation7], %s376
        %p378 = scmp.lt.s32.totalorder %s29, 1
        %s379 = scalar_select %p378, %s29, 1
        %p380 = scmp.lt.s32.totalorder %s30, 0
        %s381 = scalar_select %p380, %s30, 0
        %s382 = smul.addr %s379, 32
        %s383 = sadd.s32 %s381, %s382
        %s384 = smul.addr %s383, 8
        %s385 = scalar_lea.vmem %s0, %s384
        %v387 = vld [vmem:[%s385] sm:$0xff]
        %v388 = vld [vmem:[%s385 + $0x8] sm:$0xff]
        %v389 = vld [vmem:[%s385 + $0x10] sm:$0xff]
        %v390 = vld [vmem:[%s385 + $0x18] sm:$0xff]
        %v391 = vld [vmem:[%s385 + $0x20] sm:$0xff]
        %v392 = vld [vmem:[%s385 + $0x28] sm:$0xff]
        %v393 = vld [vmem:[%s385 + $0x30] sm:$0xff]
        %v394 = vld [vmem:[%s385 + $0x38] sm:$0xff]
        %v395 = vld [vmem:[%s385 + $0x40] sm:$0xff]
        %v396 = vld [vmem:[%s385 + $0x48] sm:$0xff]
        %v397 = vld [vmem:[%s385 + $0x50] sm:$0xff]
        %v398 = vld [vmem:[%s385 + $0x58] sm:$0xff]
        %v399 = vld [vmem:[%s385 + $0x60] sm:$0xff]
        %v400 = vld [vmem:[%s385 + $0x68] sm:$0xff]
        %v401 = vld [vmem:[%s385 + $0x70] sm:$0xff]
        %v402 = vld [vmem:[%s385 + $0x78] sm:$0xff]
        %v403 = vld [vmem:[%s385 + $0x80] sm:$0xff]
        %v404 = vld [vmem:[%s385 + $0x88] sm:$0xff]
        %v405 = vld [vmem:[%s385 + $0x90] sm:$0xff]
        %v406 = vld [vmem:[%s385 + $0x98] sm:$0xff]
        %v407 = vld [vmem:[%s385 + $0xa0] sm:$0xff]
        %v408 = vld [vmem:[%s385 + $0xa8] sm:$0xff]
        %v409 = vld [vmem:[%s385 + $0xb0] sm:$0xff]
        %v410 = vld [vmem:[%s385 + $0xb8] sm:$0xff]
        %v411 = vld [vmem:[%s385 + $0xc0] sm:$0xff]
        %v412 = vld [vmem:[%s385 + $0xc8] sm:$0xff]
        %v413 = vld [vmem:[%s385 + $0xd0] sm:$0xff]
        %v414 = vld [vmem:[%s385 + $0xd8] sm:$0xff]
        %v415 = vld [vmem:[%s385 + $0xe0] sm:$0xff]
        %v416 = vld [vmem:[%s385 + $0xe8] sm:$0xff]
        %v417 = vld [vmem:[%s385 + $0xf0] sm:$0xff]
        %v418 = vld [vmem:[%s385 + $0xf8] sm:$0xff]
        %v419 = vpack.c.bf16 %v388, %v387
        %v420 = vpack.c.bf16 %v390, %v389
        %v421 = vpack.c.bf16 %v392, %v391
        %v422 = vpack.c.bf16 %v394, %v393
        %v423 = vpack.c.bf16 %v396, %v395
        %v424 = vpack.c.bf16 %v398, %v397
        %v425 = vpack.c.bf16 %v400, %v399
        %v426 = vpack.c.bf16 %v402, %v401
        %v427 = vpack.c.bf16 %v404, %v403
        %v428 = vpack.c.bf16 %v406, %v405
        %v429 = vpack.c.bf16 %v408, %v407
        %v430 = vpack.c.bf16 %v410, %v409
        %v431 = vpack.c.bf16 %v412, %v411
        %v432 = vpack.c.bf16 %v414, %v413
        %v433 = vpack.c.bf16 %v416, %v415
        %v434 = vpack.c.bf16 %v418, %v417
        %v435 = vld [vmem:[#allocation2] sm:$0xff]
        %v436 = vld [vmem:[#allocation2 + $0x8] sm:$0xff]
        %v437 = vld [vmem:[#allocation2 + $0x10] sm:$0xff]
        %v438 = vld [vmem:[#allocation2 + $0x18] sm:$0xff]
        %v439 = vld [vmem:[#allocation2 + $0x20] sm:$0xff]
        %v440 = vld [vmem:[#allocation2 + $0x28] sm:$0xff]
        %v441 = vld [vmem:[#allocation2 + $0x30] sm:$0xff]
        %v442 = vld [vmem:[#allocation2 + $0x38] sm:$0xff]
        %v443 = vld [vmem:[#allocation2 + $0x40] sm:$0xff]
        %v444 = vld [vmem:[#allocation2 + $0x48] sm:$0xff]
        %v445 = vld [vmem:[#allocation2 + $0x50] sm:$0xff]
        %v446 = vld [vmem:[#allocation2 + $0x58] sm:$0xff]
        %v447 = vld [vmem:[#allocation2 + $0x60] sm:$0xff]
        %v448 = vld [vmem:[#allocation2 + $0x68] sm:$0xff]
        %v449 = vld [vmem:[#allocation2 + $0x70] sm:$0xff]
        %v450 = vld [vmem:[#allocation2 + $0x78] sm:$0xff]
        %v451 = vld [vmem:[#allocation2 + $0x80] sm:$0xff]
        %v452 = vld [vmem:[#allocation2 + $0x88] sm:$0xff]
        %v453 = vld [vmem:[#allocation2 + $0x90] sm:$0xff]
        %v454 = vld [vmem:[#allocation2 + $0x98] sm:$0xff]
        %v455 = vld [vmem:[#allocation2 + $0xa0] sm:$0xff]
        %v456 = vld [vmem:[#allocation2 + $0xa8] sm:$0xff]
        %v457 = vld [vmem:[#allocation2 + $0xb0] sm:$0xff]
        %v458 = vld [vmem:[#allocation2 + $0xb8] sm:$0xff]
        %v459 = vld [vmem:[#allocation2 + $0xc0] sm:$0xff]
        %v460 = vld [vmem:[#allocation2 + $0xc8] sm:$0xff]
        %v461 = vld [vmem:[#allocation2 + $0xd0] sm:$0xff]
        %v462 = vld [vmem:[#allocation2 + $0xd8] sm:$0xff]
        %v463 = vld [vmem:[#allocation2 + $0xe0] sm:$0xff]
        %v464 = vld [vmem:[#allocation2 + $0xe8] sm:$0xff]
        %v465 = vld [vmem:[#allocation2 + $0xf0] sm:$0xff]
        %v466 = vld [vmem:[#allocation2 + $0xf8] sm:$0xff]
        %v467 = vld [vmem:[#allocation2 + $0x100] sm:$0xff]
        %v468 = vld [vmem:[#allocation2 + $0x108] sm:$0xff]
        %v469 = vld [vmem:[#allocation2 + $0x110] sm:$0xff]
        %v470 = vld [vmem:[#allocation2 + $0x118] sm:$0xff]
        %v471 = vld [vmem:[#allocation2 + $0x120] sm:$0xff]
        %v472 = vld [vmem:[#allocation2 + $0x128] sm:$0xff]
        %v473 = vld [vmem:[#allocation2 + $0x130] sm:$0xff]
        %v474 = vld [vmem:[#allocation2 + $0x138] sm:$0xff]
        %v475 = vld [vmem:[#allocation2 + $0x140] sm:$0xff]
        %v476 = vld [vmem:[#allocation2 + $0x148] sm:$0xff]
        %v477 = vld [vmem:[#allocation2 + $0x150] sm:$0xff]
        %v478 = vld [vmem:[#allocation2 + $0x158] sm:$0xff]
        %v479 = vld [vmem:[#allocation2 + $0x160] sm:$0xff]
        %v480 = vld [vmem:[#allocation2 + $0x168] sm:$0xff]
        %v481 = vld [vmem:[#allocation2 + $0x170] sm:$0xff]
        %v482 = vld [vmem:[#allocation2 + $0x178] sm:$0xff]
        %v483 = vld [vmem:[#allocation2 + $0x180] sm:$0xff]
        %v484 = vld [vmem:[#allocation2 + $0x188] sm:$0xff]
        %v485 = vld [vmem:[#allocation2 + $0x190] sm:$0xff]
        %v486 = vld [vmem:[#allocation2 + $0x198] sm:$0xff]
        %v487 = vld [vmem:[#allocation2 + $0x1a0] sm:$0xff]
        %v488 = vld [vmem:[#allocation2 + $0x1a8] sm:$0xff]
        %v489 = vld [vmem:[#allocation2 + $0x1b0] sm:$0xff]
        %v490 = vld [vmem:[#allocation2 + $0x1b8] sm:$0xff]
        %v491 = vld [vmem:[#allocation2 + $0x1c0] sm:$0xff]
        %v492 = vld [vmem:[#allocation2 + $0x1c8] sm:$0xff]
        %v493 = vld [vmem:[#allocation2 + $0x1d0] sm:$0xff]
        %v494 = vld [vmem:[#allocation2 + $0x1d8] sm:$0xff]
        %v495 = vld [vmem:[#allocation2 + $0x1e0] sm:$0xff]
        %v496 = vld [vmem:[#allocation2 + $0x1e8] sm:$0xff]
        %v497 = vld [vmem:[#allocation2 + $0x1f0] sm:$0xff]
        %v498 = vld [vmem:[#allocation2 + $0x1f8] sm:$0xff]
        %v499 = vld [vmem:[%s2] sm:$0xff]
        %v500 = vld [vmem:[%s2 + $0x8] sm:$0xff]
        %v501 = vld [vmem:[%s2 + $0x10] sm:$0xff]
        %v502 = vld [vmem:[%s2 + $0x18] sm:$0xff]
        %v503 = vld [vmem:[%s2 + $0x20] sm:$0xff]
        %v504 = vld [vmem:[%s2 + $0x28] sm:$0xff]
        %v505 = vld [vmem:[%s2 + $0x30] sm:$0xff]
        %v506 = vld [vmem:[%s2 + $0x38] sm:$0xff]
        %v507 = vld [vmem:[%s2 + $0x40] sm:$0xff]
        %v508 = vld [vmem:[%s2 + $0x48] sm:$0xff]
        %v509 = vld [vmem:[%s2 + $0x50] sm:$0xff]
        %v510 = vld [vmem:[%s2 + $0x58] sm:$0xff]
        %v511 = vld [vmem:[%s2 + $0x60] sm:$0xff]
        %v512 = vld [vmem:[%s2 + $0x68] sm:$0xff]
        %v513 = vld [vmem:[%s2 + $0x70] sm:$0xff]
        %v514 = vld [vmem:[%s2 + $0x78] sm:$0xff]
        %v515 = vld [vmem:[%s2 + $0x80] sm:$0xff]
        %v516 = vld [vmem:[%s2 + $0x88] sm:$0xff]
        %v517 = vld [vmem:[%s2 + $0x90] sm:$0xff]
        %v518 = vld [vmem:[%s2 + $0x98] sm:$0xff]
        %v519 = vld [vmem:[%s2 + $0xa0] sm:$0xff]
        %v520 = vld [vmem:[%s2 + $0xa8] sm:$0xff]
        %v521 = vld [vmem:[%s2 + $0xb0] sm:$0xff]
        %v522 = vld [vmem:[%s2 + $0xb8] sm:$0xff]
        %v523 = vld [vmem:[%s2 + $0xc0] sm:$0xff]
        %v524 = vld [vmem:[%s2 + $0xc8] sm:$0xff]
        %v525 = vld [vmem:[%s2 + $0xd0] sm:$0xff]
        %v526 = vld [vmem:[%s2 + $0xd8] sm:$0xff]
        %v527 = vld [vmem:[%s2 + $0xe0] sm:$0xff]
        %v528 = vld [vmem:[%s2 + $0xe8] sm:$0xff]
        %v529 = vld [vmem:[%s2 + $0xf0] sm:$0xff]
        %v530 = vld [vmem:[%s2 + $0xf8] sm:$0xff]
        %v531 = vld [vmem:[%s2 + $0x100] sm:$0xff]
        %v532 = vld [vmem:[%s2 + $0x108] sm:$0xff]
        %v533 = vld [vmem:[%s2 + $0x110] sm:$0xff]
        %v534 = vld [vmem:[%s2 + $0x118] sm:$0xff]
        %v535 = vld [vmem:[%s2 + $0x120] sm:$0xff]
        %v536 = vld [vmem:[%s2 + $0x128] sm:$0xff]
        %v537 = vld [vmem:[%s2 + $0x130] sm:$0xff]
        %v538 = vld [vmem:[%s2 + $0x138] sm:$0xff]
        %v539 = vld [vmem:[%s2 + $0x140] sm:$0xff]
        %v540 = vld [vmem:[%s2 + $0x148] sm:$0xff]
        %v541 = vld [vmem:[%s2 + $0x150] sm:$0xff]
        %v542 = vld [vmem:[%s2 + $0x158] sm:$0xff]
        %v543 = vld [vmem:[%s2 + $0x160] sm:$0xff]
        %v544 = vld [vmem:[%s2 + $0x168] sm:$0xff]
        %v545 = vld [vmem:[%s2 + $0x170] sm:$0xff]
        %v546 = vld [vmem:[%s2 + $0x178] sm:$0xff]
        %v547 = vld [vmem:[%s2 + $0x180] sm:$0xff]
        %v548 = vld [vmem:[%s2 + $0x188] sm:$0xff]
        %v549 = vld [vmem:[%s2 + $0x190] sm:$0xff]
        %v550 = vld [vmem:[%s2 + $0x198] sm:$0xff]
        %v551 = vld [vmem:[%s2 + $0x1a0] sm:$0xff]
        %v552 = vld [vmem:[%s2 + $0x1a8] sm:$0xff]
        %v553 = vld [vmem:[%s2 + $0x1b0] sm:$0xff]
        %v554 = vld [vmem:[%s2 + $0x1b8] sm:$0xff]
        %v555 = vld [vmem:[%s2 + $0x1c0] sm:$0xff]
        %v556 = vld [vmem:[%s2 + $0x1c8] sm:$0xff]
        %v557 = vld [vmem:[%s2 + $0x1d0] sm:$0xff]
        %v558 = vld [vmem:[%s2 + $0x1d8] sm:$0xff]
        %v559 = vld [vmem:[%s2 + $0x1e0] sm:$0xff]
        %v560 = vld [vmem:[%s2 + $0x1e8] sm:$0xff]
        %v561 = vld [vmem:[%s2 + $0x1f0] sm:$0xff]
        %v562 = vld [vmem:[%s2 + $0x1f8] sm:$0xff]
        %564 = vset.pattern.permute.xlu0 0
        %565 = vperm.xlu0 %564, %v499
        %v566 = vpop.permute.xlu0 %565
        %569 = vset.pattern.permute.xlu0 0
        %570 = vperm.xlu0 %569, %v500
        %v571 = vpop.permute.xlu0 %570
        %574 = vset.pattern.permute.xlu0 0
        %575 = vperm.xlu0 %574, %v501
        %v576 = vpop.permute.xlu0 %575
        %579 = vset.pattern.permute.xlu0 0
        %580 = vperm.xlu0 %579, %v502
        %v581 = vpop.permute.xlu0 %580
        %584 = vset.pattern.permute.xlu0 0
        %585 = vperm.xlu0 %584, %v503
        %v586 = vpop.permute.xlu0 %585
        %589 = vset.pattern.permute.xlu0 0
        %590 = vperm.xlu0 %589, %v504
        %v591 = vpop.permute.xlu0 %590
        %594 = vset.pattern.permute.xlu0 0
        %595 = vperm.xlu0 %594, %v505
        %v596 = vpop.permute.xlu0 %595
        %599 = vset.pattern.permute.xlu0 0
        %600 = vperm.xlu0 %599, %v506
        %v601 = vpop.permute.xlu0 %600
        %604 = vset.pattern.permute.xlu0 0
        %605 = vperm.xlu0 %604, %v507
        %v606 = vpop.permute.xlu0 %605
        %609 = vset.pattern.permute.xlu0 0
        %610 = vperm.xlu0 %609, %v508
        %v611 = vpop.permute.xlu0 %610
        %614 = vset.pattern.permute.xlu0 0
        %615 = vperm.xlu0 %614, %v509
        %v616 = vpop.permute.xlu0 %615
        %619 = vset.pattern.permute.xlu0 0
        %620 = vperm.xlu0 %619, %v510
        %v621 = vpop.permute.xlu0 %620
        %624 = vset.pattern.permute.xlu0 0
        %625 = vperm.xlu0 %624, %v511
        %v626 = vpop.permute.xlu0 %625
        %629 = vset.pattern.permute.xlu0 0
        %630 = vperm.xlu0 %629, %v512
        %v631 = vpop.permute.xlu0 %630
        %634 = vset.pattern.permute.xlu0 0
        %635 = vperm.xlu0 %634, %v513
        %v636 = vpop.permute.xlu0 %635
        %639 = vset.pattern.permute.xlu0 0
        %640 = vperm.xlu0 %639, %v514
        %v641 = vpop.permute.xlu0 %640
        %644 = vset.pattern.permute.xlu0 0
        %645 = vperm.xlu0 %644, %v515
        %v646 = vpop.permute.xlu0 %645
        %649 = vset.pattern.permute.xlu0 0
        %650 = vperm.xlu0 %649, %v516
        %v651 = vpop.permute.xlu0 %650
        %654 = vset.pattern.permute.xlu0 0
        %655 = vperm.xlu0 %654, %v517
        %v656 = vpop.permute.xlu0 %655
        %659 = vset.pattern.permute.xlu0 0
        %660 = vperm.xlu0 %659, %v518
        %v661 = vpop.permute.xlu0 %660
        %664 = vset.pattern.permute.xlu0 0
        %665 = vperm.xlu0 %664, %v519
        %v666 = vpop.permute.xlu0 %665
        %669 = vset.pattern.permute.xlu0 0
        %670 = vperm.xlu0 %669, %v520
        %v671 = vpop.permute.xlu0 %670
        %674 = vset.pattern.permute.xlu0 0
        %675 = vperm.xlu0 %674, %v521
        %v676 = vpop.permute.xlu0 %675
        %679 = vset.pattern.permute.xlu0 0
        %680 = vperm.xlu0 %679, %v522
        %v681 = vpop.permute.xlu0 %680
        %684 = vset.pattern.permute.xlu0 0
        %685 = vperm.xlu0 %684, %v523
        %v686 = vpop.permute.xlu0 %685
        %689 = vset.pattern.permute.xlu0 0
        %690 = vperm.xlu0 %689, %v524
        %v691 = vpop.permute.xlu0 %690
        %694 = vset.pattern.permute.xlu0 0
        %695 = vperm.xlu0 %694, %v525
        %v696 = vpop.permute.xlu0 %695
        %699 = vset.pattern.permute.xlu0 0
        %700 = vperm.xlu0 %699, %v526
        %v701 = vpop.permute.xlu0 %700
        %704 = vset.pattern.permute.xlu0 0
        %705 = vperm.xlu0 %704, %v527
        %v706 = vpop.permute.xlu0 %705
        %709 = vset.pattern.permute.xlu0 0
        %710 = vperm.xlu0 %709, %v528
        %v711 = vpop.permute.xlu0 %710
        %714 = vset.pattern.permute.xlu0 0
        %715 = vperm.xlu0 %714, %v529
        %v716 = vpop.permute.xlu0 %715
        %719 = vset.pattern.permute.xlu0 0
        %720 = vperm.xlu0 %719, %v530
        %v721 = vpop.permute.xlu0 %720
        %724 = vset.pattern.permute.xlu0 0
        %725 = vperm.xlu0 %724, %v531
        %v726 = vpop.permute.xlu0 %725
        %729 = vset.pattern.permute.xlu0 0
        %730 = vperm.xlu0 %729, %v532
        %v731 = vpop.permute.xlu0 %730
        %734 = vset.pattern.permute.xlu0 0
        %735 = vperm.xlu0 %734, %v533
        %v736 = vpop.permute.xlu0 %735
        %739 = vset.pattern.permute.xlu0 0
        %740 = vperm.xlu0 %739, %v534
        %v741 = vpop.permute.xlu0 %740
        %744 = vset.pattern.permute.xlu0 0
        %745 = vperm.xlu0 %744, %v535
        %v746 = vpop.permute.xlu0 %745
        %749 = vset.pattern.permute.xlu0 0
        %750 = vperm.xlu0 %749, %v536
        %v751 = vpop.permute.xlu0 %750
        %754 = vset.pattern.permute.xlu0 0
        %755 = vperm.xlu0 %754, %v537
        %v756 = vpop.permute.xlu0 %755
        %759 = vset.pattern.permute.xlu0 0
        %760 = vperm.xlu0 %759, %v538
        %v761 = vpop.permute.xlu0 %760
        %764 = vset.pattern.permute.xlu0 0
        %765 = vperm.xlu0 %764, %v539
        %v766 = vpop.permute.xlu0 %765
        %769 = vset.pattern.permute.xlu0 0
        %770 = vperm.xlu0 %769, %v540
        %v771 = vpop.permute.xlu0 %770
        %774 = vset.pattern.permute.xlu0 0
        %775 = vperm.xlu0 %774, %v541
        %v776 = vpop.permute.xlu0 %775
        %779 = vset.pattern.permute.xlu0 0
        %780 = vperm.xlu0 %779, %v542
        %v781 = vpop.permute.xlu0 %780
        %784 = vset.pattern.permute.xlu0 0
        %785 = vperm.xlu0 %784, %v543
        %v786 = vpop.permute.xlu0 %785
        %789 = vset.pattern.permute.xlu0 0
        %790 = vperm.xlu0 %789, %v544
        %v791 = vpop.permute.xlu0 %790
        %794 = vset.pattern.permute.xlu0 0
        %795 = vperm.xlu0 %794, %v545
        %v796 = vpop.permute.xlu0 %795
        %799 = vset.pattern.permute.xlu0 0
        %800 = vperm.xlu0 %799, %v546
        %v801 = vpop.permute.xlu0 %800
        %804 = vset.pattern.permute.xlu0 0
        %805 = vperm.xlu0 %804, %v547
        %v806 = vpop.permute.xlu0 %805
        %809 = vset.pattern.permute.xlu0 0
        %810 = vperm.xlu0 %809, %v548
        %v811 = vpop.permute.xlu0 %810
        %814 = vset.pattern.permute.xlu0 0
        %815 = vperm.xlu0 %814, %v549
        %v816 = vpop.permute.xlu0 %815
        %819 = vset.pattern.permute.xlu0 0
        %820 = vperm.xlu0 %819, %v550
        %v821 = vpop.permute.xlu0 %820
        %824 = vset.pattern.permute.xlu0 0
        %825 = vperm.xlu0 %824, %v551
        %v826 = vpop.permute.xlu0 %825
        %829 = vset.pattern.permute.xlu0 0
        %830 = vperm.xlu0 %829, %v552
        %v831 = vpop.permute.xlu0 %830
        %834 = vset.pattern.permute.xlu0 0
        %835 = vperm.xlu0 %834, %v553
        %v836 = vpop.permute.xlu0 %835
        %839 = vset.pattern.permute.xlu0 0
        %840 = vperm.xlu0 %839, %v554
        %v841 = vpop.permute.xlu0 %840
        %844 = vset.pattern.permute.xlu0 0
        %845 = vperm.xlu0 %844, %v555
        %v846 = vpop.permute.xlu0 %845
        %849 = vset.pattern.permute.xlu0 0
        %850 = vperm.xlu0 %849, %v556
        %v851 = vpop.permute.xlu0 %850
        %854 = vset.pattern.permute.xlu0 0
        %855 = vperm.xlu0 %854, %v557
        %v856 = vpop.permute.xlu0 %855
        %859 = vset.pattern.permute.xlu0 0
        %860 = vperm.xlu0 %859, %v558
        %v861 = vpop.permute.xlu0 %860
        %864 = vset.pattern.permute.xlu0 0
        %865 = vperm.xlu0 %864, %v559
        %v866 = vpop.permute.xlu0 %865
        %869 = vset.pattern.permute.xlu0 0
        %870 = vperm.xlu0 %869, %v560
        %v871 = vpop.permute.xlu0 %870
        %874 = vset.pattern.permute.xlu0 0
        %875 = vperm.xlu0 %874, %v561
        %v876 = vpop.permute.xlu0 %875
        %879 = vset.pattern.permute.xlu0 0
        %880 = vperm.xlu0 %879, %v562
        %v881 = vpop.permute.xlu0 %880
        %v947 = vunpack.c.l.b16 %v435
        %v948 = vunpack.c.h.b16 %v435
        %v949 = vunpack.c.l.b16 %v436
        %v950 = vunpack.c.h.b16 %v436
        %v951 = vunpack.c.l.b16 %v437
        %v952 = vunpack.c.h.b16 %v437
        %v953 = vunpack.c.l.b16 %v438
        %v954 = vunpack.c.h.b16 %v438
        %v955 = vunpack.c.l.b16 %v439
        %v956 = vunpack.c.h.b16 %v439
        %v957 = vunpack.c.l.b16 %v440
        %v958 = vunpack.c.h.b16 %v440
        %v959 = vunpack.c.l.b16 %v441
        %v960 = vunpack.c.h.b16 %v441
        %v961 = vunpack.c.l.b16 %v442
        %v962 = vunpack.c.h.b16 %v442
        %v963 = vunpack.c.l.b16 %v443
        %v964 = vunpack.c.h.b16 %v443
        %v965 = vunpack.c.l.b16 %v444
        %v966 = vunpack.c.h.b16 %v444
        %v967 = vunpack.c.l.b16 %v445
        %v968 = vunpack.c.h.b16 %v445
        %v969 = vunpack.c.l.b16 %v446
        %v970 = vunpack.c.h.b16 %v446
        %v971 = vunpack.c.l.b16 %v447
        %v972 = vunpack.c.h.b16 %v447
        %v973 = vunpack.c.l.b16 %v448
        %v974 = vunpack.c.h.b16 %v448
        %v975 = vunpack.c.l.b16 %v449
        %v976 = vunpack.c.h.b16 %v449
        %v977 = vunpack.c.l.b16 %v450
        %v978 = vunpack.c.h.b16 %v450
        %v979 = vunpack.c.l.b16 %v451
        %v980 = vunpack.c.h.b16 %v451
        %v981 = vunpack.c.l.b16 %v452
        %v982 = vunpack.c.h.b16 %v452
        %v983 = vunpack.c.l.b16 %v453
        %v984 = vunpack.c.h.b16 %v453
        %v985 = vunpack.c.l.b16 %v454
        %v986 = vunpack.c.h.b16 %v454
        %v987 = vunpack.c.l.b16 %v455
        %v988 = vunpack.c.h.b16 %v455
        %v989 = vunpack.c.l.b16 %v456
        %v990 = vunpack.c.h.b16 %v456
        %v991 = vunpack.c.l.b16 %v457
        %v992 = vunpack.c.h.b16 %v457
        %v993 = vunpack.c.l.b16 %v458
        %v994 = vunpack.c.h.b16 %v458
        %v995 = vunpack.c.l.b16 %v459
        %v996 = vunpack.c.h.b16 %v459
        %v997 = vunpack.c.l.b16 %v460
        %v998 = vunpack.c.h.b16 %v460
        %v999 = vunpack.c.l.b16 %v461
        %v1000 = vunpack.c.h.b16 %v461
        %v1001 = vunpack.c.l.b16 %v462
        %v1002 = vunpack.c.h.b16 %v462
        %v1003 = vunpack.c.l.b16 %v463
        %v1004 = vunpack.c.h.b16 %v463
        %v1005 = vunpack.c.l.b16 %v464
        %v1006 = vunpack.c.h.b16 %v464
        %v1007 = vunpack.c.l.b16 %v465
        %v1008 = vunpack.c.h.b16 %v465
        %v1009 = vunpack.c.l.b16 %v466
        %v1010 = vunpack.c.h.b16 %v466
        %v1011 = vunpack.c.l.b16 %v467
        %v1012 = vunpack.c.h.b16 %v467
        %v1013 = vunpack.c.l.b16 %v468
        %v1014 = vunpack.c.h.b16 %v468
        %v1015 = vunpack.c.l.b16 %v469
        %v1016 = vunpack.c.h.b16 %v469
        %v1017 = vunpack.c.l.b16 %v470
        %v1018 = vunpack.c.h.b16 %v470
        %v1019 = vunpack.c.l.b16 %v471
        %v1020 = vunpack.c.h.b16 %v471
        %v1021 = vunpack.c.l.b16 %v472
        %v1022 = vunpack.c.h.b16 %v472
        %v1023 = vunpack.c.l.b16 %v473
        %v1024 = vunpack.c.h.b16 %v473
        %v1025 = vunpack.c.l.b16 %v474
        %v1026 = vunpack.c.h.b16 %v474
        %v1027 = vunpack.c.l.b16 %v475
        %v1028 = vunpack.c.h.b16 %v475
        %v1029 = vunpack.c.l.b16 %v476
        %v1030 = vunpack.c.h.b16 %v476
        %v1031 = vunpack.c.l.b16 %v477
        %v1032 = vunpack.c.h.b16 %v477
        %v1033 = vunpack.c.l.b16 %v478
        %v1034 = vunpack.c.h.b16 %v478
        %v1035 = vunpack.c.l.b16 %v479
        %v1036 = vunpack.c.h.b16 %v479
        %v1037 = vunpack.c.l.b16 %v480
        %v1038 = vunpack.c.h.b16 %v480
        %v1039 = vunpack.c.l.b16 %v481
        %v1040 = vunpack.c.h.b16 %v481
        %v1041 = vunpack.c.l.b16 %v482
        %v1042 = vunpack.c.h.b16 %v482
        %v1043 = vunpack.c.l.b16 %v483
        %v1044 = vunpack.c.h.b16 %v483
        %v1045 = vunpack.c.l.b16 %v484
        %v1046 = vunpack.c.h.b16 %v484
        %v1047 = vunpack.c.l.b16 %v485
        %v1048 = vunpack.c.h.b16 %v485
        %v1049 = vunpack.c.l.b16 %v486
        %v1050 = vunpack.c.h.b16 %v486
        %v1051 = vunpack.c.l.b16 %v487
        %v1052 = vunpack.c.h.b16 %v487
        %v1053 = vunpack.c.l.b16 %v488
        %v1054 = vunpack.c.h.b16 %v488
        %v1055 = vunpack.c.l.b16 %v489
        %v1056 = vunpack.c.h.b16 %v489
        %v1057 = vunpack.c.l.b16 %v490
        %v1058 = vunpack.c.h.b16 %v490
        %v1059 = vunpack.c.l.b16 %v491
        %v1060 = vunpack.c.h.b16 %v491
        %v1061 = vunpack.c.l.b16 %v492
        %v1062 = vunpack.c.h.b16 %v492
        %v1063 = vunpack.c.l.b16 %v493
        %v1064 = vunpack.c.h.b16 %v493
        %v1065 = vunpack.c.l.b16 %v494
        %v1066 = vunpack.c.h.b16 %v494
        %v1067 = vunpack.c.l.b16 %v495
        %v1068 = vunpack.c.h.b16 %v495
        %v1069 = vunpack.c.l.b16 %v496
        %v1070 = vunpack.c.h.b16 %v496
        %v1071 = vunpack.c.l.b16 %v497
        %v1072 = vunpack.c.h.b16 %v497
        %v1073 = vunpack.c.l.b16 %v498
        %v1074 = vunpack.c.h.b16 %v498
        %v1075 = vpack.c.b16 %v949, %v947
        %v1076 = vpack.c.b16 %v950, %v948
        %v1077 = vpack.c.b16 %v953, %v951
        %v1078 = vpack.c.b16 %v954, %v952
        %v1079 = vpack.c.b16 %v957, %v955
        %v1080 = vpack.c.b16 %v958, %v956
        %v1081 = vpack.c.b16 %v961, %v959
        %v1082 = vpack.c.b16 %v962, %v960
        %v1083 = vpack.c.b16 %v965, %v963
        %v1084 = vpack.c.b16 %v966, %v964
        %v1085 = vpack.c.b16 %v969, %v967
        %v1086 = vpack.c.b16 %v970, %v968
        %v1087 = vpack.c.b16 %v973, %v971
        %v1088 = vpack.c.b16 %v974, %v972
        %v1089 = vpack.c.b16 %v977, %v975
        %v1090 = vpack.c.b16 %v978, %v976
        %v1091 = vpack.c.b16 %v981, %v979
        %v1092 = vpack.c.b16 %v982, %v980
        %v1093 = vpack.c.b16 %v985, %v983
        %v1094 = vpack.c.b16 %v986, %v984
        %v1095 = vpack.c.b16 %v989, %v987
        %v1096 = vpack.c.b16 %v990, %v988
        %v1097 = vpack.c.b16 %v993, %v991
        %v1098 = vpack.c.b16 %v994, %v992
        %v1099 = vpack.c.b16 %v997, %v995
        %v1100 = vpack.c.b16 %v998, %v996
        %v1101 = vpack.c.b16 %v1001, %v999
        %v1102 = vpack.c.b16 %v1002, %v1000
        %v1103 = vpack.c.b16 %v1005, %v1003
        %v1104 = vpack.c.b16 %v1006, %v1004
        %v1105 = vpack.c.b16 %v1009, %v1007
        %v1106 = vpack.c.b16 %v1010, %v1008
        %v1107 = vpack.c.b16 %v1013, %v1011
        %v1108 = vpack.c.b16 %v1014, %v1012
        %v1109 = vpack.c.b16 %v1017, %v1015
        %v1110 = vpack.c.b16 %v1018, %v1016
        %v1111 = vpack.c.b16 %v1021, %v1019
        %v1112 = vpack.c.b16 %v1022, %v1020
        %v1113 = vpack.c.b16 %v1025, %v1023
        %v1114 = vpack.c.b16 %v1026, %v1024
        %v1115 = vpack.c.b16 %v1029, %v1027
        %v1116 = vpack.c.b16 %v1030, %v1028
        %v1117 = vpack.c.b16 %v1033, %v1031
        %v1118 = vpack.c.b16 %v1034, %v1032
        %v1119 = vpack.c.b16 %v1037, %v1035
        %v1120 = vpack.c.b16 %v1038, %v1036
        %v1121 = vpack.c.b16 %v1041, %v1039
        %v1122 = vpack.c.b16 %v1042, %v1040
        %v1123 = vpack.c.b16 %v1045, %v1043
        %v1124 = vpack.c.b16 %v1046, %v1044
        %v1125 = vpack.c.b16 %v1049, %v1047
        %v1126 = vpack.c.b16 %v1050, %v1048
        %v1127 = vpack.c.b16 %v1053, %v1051
        %v1128 = vpack.c.b16 %v1054, %v1052
        %v1129 = vpack.c.b16 %v1057, %v1055
        %v1130 = vpack.c.b16 %v1058, %v1056
        %v1131 = vpack.c.b16 %v1061, %v1059
        %v1132 = vpack.c.b16 %v1062, %v1060
        %v1133 = vpack.c.b16 %v1065, %v1063
        %v1134 = vpack.c.b16 %v1066, %v1064
        %v1135 = vpack.c.b16 %v1069, %v1067
        %v1136 = vpack.c.b16 %v1070, %v1068
        %v1137 = vpack.c.b16 %v1073, %v1071
        %v1138 = vpack.c.b16 %v1074, %v1072
        %1203 = vmatprep.subr.bf16.mxu0 0
        %1204 = vmatpush1.bf16.msra.mxu0 %v419
        %1205 = vmatprep.subr.bf16.mxu0 0
        %1206 = vmatpush1.bf16.msra.mxu0 %v420
        %1207 = vmatprep.subr.bf16.mxu0 0
        %1208 = vmatpush1.bf16.msra.mxu0 %v421
        %1209 = vmatprep.subr.bf16.mxu0 0
        %1210 = vmatpush1.bf16.msra.mxu0 %v422
        %1211 = vmatprep.subr.bf16.mxu0 0
        %1212 = vmatpush1.bf16.msra.mxu0 %v423
        %1213 = vmatprep.subr.bf16.mxu0 0
        %1214 = vmatpush1.bf16.msra.mxu0 %v424
        %1215 = vmatprep.subr.bf16.mxu0 0
        %1216 = vmatpush1.bf16.msra.mxu0 %v425
        %1217 = vmatprep.subr.bf16.mxu0 0
        %1218 = vmatpush1.bf16.msra.mxu0 %v426
        %1219 = vmatprep.subr.bf16.mxu0 0
        %1220 = vmatpush1.bf16.msra.mxu0 %v427
        %1221 = vmatprep.subr.bf16.mxu0 0
        %1222 = vmatpush1.bf16.msra.mxu0 %v428
        %1223 = vmatprep.subr.bf16.mxu0 0
        %1224 = vmatpush1.bf16.msra.mxu0 %v429
        %1225 = vmatprep.subr.bf16.mxu0 0
        %1226 = vmatpush1.bf16.msra.mxu0 %v430
        %1227 = vmatprep.subr.bf16.mxu0 0
        %1228 = vmatpush1.bf16.msra.mxu0 %v431
        %1229 = vmatprep.subr.bf16.mxu0 0
        %1230 = vmatpush1.bf16.msra.mxu0 %v432
        %1231 = vmatprep.subr.bf16.mxu0 0
        %1232 = vmatpush1.bf16.msra.mxu0 %v433
        %1233 = vmatprep.subr.bf16.mxu0 0
        %1234 = vmatpush1.bf16.msra.mxu0 %v434
        %1235 = vmatprep.mubr.bf16.mxu0 %v1076
        %1236 = vmatmul.mubr.bf16.gmra.mrb[0].mxu0 %v1075
        %v1237 = vpop.f32.mrb[0].mxu0
        %v1238 = vadd.f32 %v566, %v1237
        %v1239 = vpop.f32.mrb[0].mxu0
        %v1240 = vpop.f32.mrb[0].mxu0
        %v1241 = vadd.f32 %v571, %v1240
        %v1242 = vpop.f32.mrb[0].mxu0
        %1243 = vmatprep.mubr.bf16.mxu0 %v1078
        %1244 = vmatmul.mubr.bf16.gmra.mrb[0].mxu0 %v1077
        %v1245 = vpop.f32.mrb[0].mxu0
        %v1246 = vadd.f32 %v576, %v1245
        %v1247 = vpop.f32.mrb[0].mxu0
        %v1248 = vpop.f32.mrb[0].mxu0
        %v1249 = vadd.f32 %v581, %v1248
        %v1250 = vpop.f32.mrb[0].mxu0
        %1251 = vmatprep.mubr.bf16.mxu0 %v1080
        %1252 = vmatmul.mubr.bf16.gmra.mrb[0].mxu0 %v1079
        %v1253 = vpop.f32.mrb[0].mxu0
        %v1254 = vadd.f32 %v586, %v1253
        %v1255 = vpop.f32.mrb[0].mxu0
        %v1256 = vpop.f32.mrb[0].mxu0
        %v1257 = vadd.f32 %v591, %v1256
        %v1258 = vpop.f32.mrb[0].mxu0
        %1259 = vmatprep.mubr.bf16.mxu0 %v1082
        %1260 = vmatmul.mubr.bf16.gmra.mrb[0].mxu0 %v1081
        %v1261 = vpop.f32.mrb[0].mxu0
        %v1262 = vadd.f32 %v596, %v1261
        %v1263 = vpop.f32.mrb[0].mxu0
        %v1264 = vpop.f32.mrb[0].mxu0
        %v1265 = vadd.f32 %v601, %v1264
        %v1266 = vpop.f32.mrb[0].mxu0
        %1267 = vmatprep.mubr.bf16.mxu0 %v1084
        %1268 = vmatmul.mubr.bf16.gmra.mrb[0].mxu0 %v1083
        %v1269 = vpop.f32.mrb[0].mxu0
        %v1270 = vadd.f32 %v606, %v1269
        %v1271 = vpop.f32.mrb[0].mxu0
        %v1272 = vpop.f32.mrb[0].mxu0
        %v1273 = vadd.f32 %v611, %v1272
        %v1274 = vpop.f32.mrb[0].mxu0
        %1275 = vmatprep.mubr.bf16.mxu0 %v1086
        %1276 = vmatmul.mubr.bf16.gmra.mrb[0].mxu0 %v1085
        %v1277 = vpop.f32.mrb[0].mxu0
        %v1278 = vadd.f32 %v616, %v1277
        %v1279 = vpop.f32.mrb[0].mxu0
        %v1280 = vpop.f32.mrb[0].mxu0
        %v1281 = vadd.f32 %v621, %v1280
        %v1282 = vpop.f32.mrb[0].mxu0
        %1283 = vmatprep.mubr.bf16.mxu0 %v1088
        %1284 = vmatmul.mubr.bf16.gmra.mrb[0].mxu0 %v1087
        %v1285 = vpop.f32.mrb[0].mxu0
        %v1286 = vadd.f32 %v626, %v1285
        %v1287 = vpop.f32.mrb[0].mxu0
        %v1288 = vpop.f32.mrb[0].mxu0
        %v1289 = vadd.f32 %v631, %v1288
        %v1290 = vpop.f32.mrb[0].mxu0
        %1291 = vmatprep.mubr.bf16.mxu0 %v1090
        %1292 = vmatmul.mubr.bf16.gmra.mrb[0].mxu0 %v1089
        %v1293 = vpop.f32.mrb[0].mxu0
        %v1294 = vadd.f32 %v636, %v1293
        %v1295 = vpop.f32.mrb[0].mxu0
        %v1296 = vpop.f32.mrb[0].mxu0
        %v1297 = vadd.f32 %v641, %v1296
        %v1298 = vpop.f32.mrb[0].mxu0
        %1299 = vmatprep.mubr.bf16.mxu0 %v1092
        %1300 = vmatmul.mubr.bf16.gmra.mrb[0].mxu0 %v1091
        %v1301 = vpop.f32.mrb[0].mxu0
        %v1302 = vadd.f32 %v646, %v1301
        %v1303 = vpop.f32.mrb[0].mxu0
        %v1304 = vpop.f32.mrb[0].mxu0
        %v1305 = vadd.f32 %v651, %v1304
        %v1306 = vpop.f32.mrb[0].mxu0
        %1307 = vmatprep.mubr.bf16.mxu0 %v1094
        %1308 = vmatmul.mubr.bf16.gmra.mrb[0].mxu0 %v1093
        %v1309 = vpop.f32.mrb[0].mxu0
        %v1310 = vadd.f32 %v656, %v1309
        %v1311 = vpop.f32.mrb[0].mxu0
        %v1312 = vpop.f32.mrb[0].mxu0
        %v1313 = vadd.f32 %v661, %v1312
        %v1314 = vpop.f32.mrb[0].mxu0
        %1315 = vmatprep.mubr.bf16.mxu0 %v1096
        %1316 = vmatmul.mubr.bf16.gmra.mrb[0].mxu0 %v1095
        %v1317 = vpop.f32.mrb[0].mxu0
        %v1318 = vadd.f32 %v666, %v1317
        %v1319 = vpop.f32.mrb[0].mxu0
        %v1320 = vpop.f32.mrb[0].mxu0
        %v1321 = vadd.f32 %v671, %v1320
        %v1322 = vpop.f32.mrb[0].mxu0
        %1323 = vmatprep.mubr.bf16.mxu0 %v1098
        %1324 = vmatmul.mubr.bf16.gmra.mrb[0].mxu0 %v1097
        %v1325 = vpop.f32.mrb[0].mxu0
        %v1326 = vadd.f32 %v676, %v1325
        %v1327 = vpop.f32.mrb[0].mxu0
        %v1328 = vpop.f32.mrb[0].mxu0
        %v1329 = vadd.f32 %v681, %v1328
        %v1330 = vpop.f32.mrb[0].mxu0
        %1331 = vmatprep.mubr.bf16.mxu0 %v1100
        %1332 = vmatmul.mubr.bf16.gmra.mrb[0].mxu0 %v1099
        %v1333 = vpop.f32.mrb[0].mxu0
        %v1334 = vadd.f32 %v686, %v1333
        %v1335 = vpop.f32.mrb[0].mxu0
        %v1336 = vpop.f32.mrb[0].mxu0
        %v1337 = vadd.f32 %v691, %v1336
        %v1338 = vpop.f32.mrb[0].mxu0
        %1339 = vmatprep.mubr.bf16.mxu0 %v1102
        %1340 = vmatmul.mubr.bf16.gmra.mrb[0].mxu0 %v1101
        %v1341 = vpop.f32.mrb[0].mxu0
        %v1342 = vadd.f32 %v696, %v1341
        %v1343 = vpop.f32.mrb[0].mxu0
        %v1344 = vpop.f32.mrb[0].mxu0
        %v1345 = vadd.f32 %v701, %v1344
        %v1346 = vpop.f32.mrb[0].mxu0
        %1347 = vmatprep.mubr.bf16.mxu0 %v1104
        %1348 = vmatmul.mubr.bf16.gmra.mrb[0].mxu0 %v1103
        %v1349 = vpop.f32.mrb[0].mxu0
        %v1350 = vadd.f32 %v706, %v1349
        %v1351 = vpop.f32.mrb[0].mxu0
        %v1352 = vpop.f32.mrb[0].mxu0
        %v1353 = vadd.f32 %v711, %v1352
        %v1354 = vpop.f32.mrb[0].mxu0
        %1355 = vmatprep.mubr.bf16.mxu0 %v1106
        %1356 = vmatmul.mubr.bf16.gmra.mrb[0].mxu0 %v1105
        %v1357 = vpop.f32.mrb[0].mxu0
        %v1358 = vadd.f32 %v716, %v1357
        %v1359 = vpop.f32.mrb[0].mxu0
        %v1360 = vpop.f32.mrb[0].mxu0
        %v1361 = vadd.f32 %v721, %v1360
        %v1362 = vpop.f32.mrb[0].mxu0
        %1363 = vmatprep.mubr.bf16.mxu0 %v1108
        %1364 = vmatmul.mubr.bf16.gmra.mrb[0].mxu0 %v1107
        %v1365 = vpop.f32.mrb[0].mxu0
        %v1366 = vadd.f32 %v726, %v1365
        %v1367 = vpop.f32.mrb[0].mxu0
        %v1368 = vpop.f32.mrb[0].mxu0
        %v1369 = vadd.f32 %v731, %v1368
        %v1370 = vpop.f32.mrb[0].mxu0
        %1371 = vmatprep.mubr.bf16.mxu0 %v1110
        %1372 = vmatmul.mubr.bf16.gmra.mrb[0].mxu0 %v1109
        %v1373 = vpop.f32.mrb[0].mxu0
        %v1374 = vadd.f32 %v736, %v1373
        %v1375 = vpop.f32.mrb[0].mxu0
        %v1376 = vpop.f32.mrb[0].mxu0
        %v1377 = vadd.f32 %v741, %v1376
        %v1378 = vpop.f32.mrb[0].mxu0
        %1379 = vmatprep.mubr.bf16.mxu0 %v1112
        %1380 = vmatmul.mubr.bf16.gmra.mrb[0].mxu0 %v1111
        %v1381 = vpop.f32.mrb[0].mxu0
        %v1382 = vadd.f32 %v746, %v1381
        %v1383 = vpop.f32.mrb[0].mxu0
        %v1384 = vpop.f32.mrb[0].mxu0
        %v1385 = vadd.f32 %v751, %v1384
        %v1386 = vpop.f32.mrb[0].mxu0
        %1387 = vmatprep.mubr.bf16.mxu0 %v1114
        %1388 = vmatmul.mubr.bf16.gmra.mrb[0].mxu0 %v1113
        %v1389 = vpop.f32.mrb[0].mxu0
        %v1390 = vadd.f32 %v756, %v1389
        %v1391 = vpop.f32.mrb[0].mxu0
        %v1392 = vpop.f32.mrb[0].mxu0
        %v1393 = vadd.f32 %v761, %v1392
        %v1394 = vpop.f32.mrb[0].mxu0
        %1395 = vmatprep.mubr.bf16.mxu0 %v1116
        %1396 = vmatmul.mubr.bf16.gmra.mrb[0].mxu0 %v1115
        %v1397 = vpop.f32.mrb[0].mxu0
        %v1398 = vadd.f32 %v766, %v1397
        %v1399 = vpop.f32.mrb[0].mxu0
        %v1400 = vpop.f32.mrb[0].mxu0
        %v1401 = vadd.f32 %v771, %v1400
        %v1402 = vpop.f32.mrb[0].mxu0
        %1403 = vmatprep.mubr.bf16.mxu0 %v1118
        %1404 = vmatmul.mubr.bf16.gmra.mrb[0].mxu0 %v1117
        %v1405 = vpop.f32.mrb[0].mxu0
        %v1406 = vadd.f32 %v776, %v1405
        %v1407 = vpop.f32.mrb[0].mxu0
        %v1408 = vpop.f32.mrb[0].mxu0
        %v1409 = vadd.f32 %v781, %v1408
        %v1410 = vpop.f32.mrb[0].mxu0
        %1411 = vmatprep.mubr.bf16.mxu0 %v1120
        %1412 = vmatmul.mubr.bf16.gmra.mrb[0].mxu0 %v1119
        %v1413 = vpop.f32.mrb[0].mxu0
        %v1414 = vadd.f32 %v786, %v1413
        %v1415 = vpop.f32.mrb[0].mxu0
        %v1416 = vpop.f32.mrb[0].mxu0
        %v1417 = vadd.f32 %v791, %v1416
        %v1418 = vpop.f32.mrb[0].mxu0
        %1419 = vmatprep.mubr.bf16.mxu0 %v1122
        %1420 = vmatmul.mubr.bf16.gmra.mrb[0].mxu0 %v1121
        %v1421 = vpop.f32.mrb[0].mxu0
        %v1422 = vadd.f32 %v796, %v1421
        %v1423 = vpop.f32.mrb[0].mxu0
        %v1424 = vpop.f32.mrb[0].mxu0
        %v1425 = vadd.f32 %v801, %v1424
        %v1426 = vpop.f32.mrb[0].mxu0
        %1427 = vmatprep.mubr.bf16.mxu0 %v1124
        %1428 = vmatmul.mubr.bf16.gmra.mrb[0].mxu0 %v1123
        %v1429 = vpop.f32.mrb[0].mxu0
        %v1430 = vadd.f32 %v806, %v1429
        %v1431 = vpop.f32.mrb[0].mxu0
        %v1432 = vpop.f32.mrb[0].mxu0
        %v1433 = vadd.f32 %v811, %v1432
        %v1434 = vpop.f32.mrb[0].mxu0
        %1435 = vmatprep.mubr.bf16.mxu0 %v1126
        %1436 = vmatmul.mubr.bf16.gmra.mrb[0].mxu0 %v1125
        %v1437 = vpop.f32.mrb[0].mxu0
        %v1438 = vadd.f32 %v816, %v1437
        %v1439 = vpop.f32.mrb[0].mxu0
        %v1440 = vpop.f32.mrb[0].mxu0
        %v1441 = vadd.f32 %v821, %v1440
        %v1442 = vpop.f32.mrb[0].mxu0
        %1443 = vmatprep.mubr.bf16.mxu0 %v1128
        %1444 = vmatmul.mubr.bf16.gmra.mrb[0].mxu0 %v1127
        %v1445 = vpop.f32.mrb[0].mxu0
        %v1446 = vadd.f32 %v826, %v1445
        %v1447 = vpop.f32.mrb[0].mxu0
        %v1448 = vpop.f32.mrb[0].mxu0
        %v1449 = vadd.f32 %v831, %v1448
        %v1450 = vpop.f32.mrb[0].mxu0
        %1451 = vmatprep.mubr.bf16.mxu0 %v1130
        %1452 = vmatmul.mubr.bf16.gmra.mrb[0].mxu0 %v1129
        %v1453 = vpop.f32.mrb[0].mxu0
        %v1454 = vadd.f32 %v836, %v1453
        %v1455 = vpop.f32.mrb[0].mxu0
        %v1456 = vpop.f32.mrb[0].mxu0
        %v1457 = vadd.f32 %v841, %v1456
        %v1458 = vpop.f32.mrb[0].mxu0
        %1459 = vmatprep.mubr.bf16.mxu0 %v1132
        %1460 = vmatmul.mubr.bf16.gmra.mrb[0].mxu0 %v1131
        %v1461 = vpop.f32.mrb[0].mxu0
        %v1462 = vadd.f32 %v846, %v1461
        %v1463 = vpop.f32.mrb[0].mxu0
        %v1464 = vpop.f32.mrb[0].mxu0
        %v1465 = vadd.f32 %v851, %v1464
        %v1466 = vpop.f32.mrb[0].mxu0
        %1467 = vmatprep.mubr.bf16.mxu0 %v1134
        %1468 = vmatmul.mubr.bf16.gmra.mrb[0].mxu0 %v1133
        %v1469 = vpop.f32.mrb[0].mxu0
        %v1470 = vadd.f32 %v856, %v1469
        %v1471 = vpop.f32.mrb[0].mxu0
        %v1472 = vpop.f32.mrb[0].mxu0
        %v1473 = vadd.f32 %v861, %v1472
        %v1474 = vpop.f32.mrb[0].mxu0
        %1475 = vmatprep.mubr.bf16.mxu0 %v1136
        %1476 = vmatmul.mubr.bf16.gmra.mrb[0].mxu0 %v1135
        %v1477 = vpop.f32.mrb[0].mxu0
        %v1478 = vadd.f32 %v866, %v1477
        %v1479 = vpop.f32.mrb[0].mxu0
        %v1480 = vpop.f32.mrb[0].mxu0
        %v1481 = vadd.f32 %v871, %v1480
        %v1482 = vpop.f32.mrb[0].mxu0
        %1483 = vmatprep.mubr.bf16.mxu0 %v1138
        %1484 = vmatmul.mubr.bf16.gmra.mrb[0].mxu0 %v1137
        %v1485 = vpop.f32.mrb[0].mxu0
        %v1486 = vadd.f32 %v876, %v1485
        %v1487 = vpop.f32.mrb[0].mxu0
        %v1488 = vpop.f32.mrb[0].mxu0
        %v1489 = vadd.f32 %v881, %v1488
        %v1490 = vpop.f32.mrb[0].mxu0
        %1491 = vdwg.mxu0
        %v1492 = vmax.f32 %v1238, 0.0
        %v1493 = vmax.f32 %v1241, 0.0
        %v1494 = vmax.f32 %v1246, 0.0
        %v1495 = vmax.f32 %v1249, 0.0
        %v1496 = vmax.f32 %v1254, 0.0
        %v1497 = vmax.f32 %v1257, 0.0
        %v1498 = vmax.f32 %v1262, 0.0
        %v1499 = vmax.f32 %v1265, 0.0
        %v1500 = vmax.f32 %v1270, 0.0
        %v1501 = vmax.f32 %v1273, 0.0
        %v1502 = vmax.f32 %v1278, 0.0
        %v1503 = vmax.f32 %v1281, 0.0
        %v1504 = vmax.f32 %v1286, 0.0
        %v1505 = vmax.f32 %v1289, 0.0
        %v1506 = vmax.f32 %v1294, 0.0
        %v1507 = vmax.f32 %v1297, 0.0
        %v1508 = vmax.f32 %v1302, 0.0
        %v1509 = vmax.f32 %v1305, 0.0
        %v1510 = vmax.f32 %v1310, 0.0
        %v1511 = vmax.f32 %v1313, 0.0
        %v1512 = vmax.f32 %v1318, 0.0
        %v1513 = vmax.f32 %v1321, 0.0
        %v1514 = vmax.f32 %v1326, 0.0
        %v1515 = vmax.f32 %v1329, 0.0
        %v1516 = vmax.f32 %v1334, 0.0
        %v1517 = vmax.f32 %v1337, 0.0
        %v1518 = vmax.f32 %v1342, 0.0
        %v1519 = vmax.f32 %v1345, 0.0
        %v1520 = vmax.f32 %v1350, 0.0
        %v1521 = vmax.f32 %v1353, 0.0
        %v1522 = vmax.f32 %v1358, 0.0
        %v1523 = vmax.f32 %v1361, 0.0
        %v1524 = vmax.f32 %v1366, 0.0
        %v1525 = vmax.f32 %v1369, 0.0
        %v1526 = vmax.f32 %v1374, 0.0
        %v1527 = vmax.f32 %v1377, 0.0
        %v1528 = vmax.f32 %v1382, 0.0
        %v1529 = vmax.f32 %v1385, 0.0
        %v1530 = vmax.f32 %v1390, 0.0
        %v1531 = vmax.f32 %v1393, 0.0
        %v1532 = vmax.f32 %v1398, 0.0
        %v1533 = vmax.f32 %v1401, 0.0
        %v1534 = vmax.f32 %v1406, 0.0
        %v1535 = vmax.f32 %v1409, 0.0
        %v1536 = vmax.f32 %v1414, 0.0
        %v1537 = vmax.f32 %v1417, 0.0
        %v1538 = vmax.f32 %v1422, 0.0
        %v1539 = vmax.f32 %v1425, 0.0
        %v1540 = vmax.f32 %v1430, 0.0
        %v1541 = vmax.f32 %v1433, 0.0
        %v1542 = vmax.f32 %v1438, 0.0
        %v1543 = vmax.f32 %v1441, 0.0
        %v1544 = vmax.f32 %v1446, 0.0
        %v1545 = vmax.f32 %v1449, 0.0
        %v1546 = vmax.f32 %v1454, 0.0
        %v1547 = vmax.f32 %v1457, 0.0
        %v1548 = vmax.f32 %v1462, 0.0
        %v1549 = vmax.f32 %v1465, 0.0
        %v1550 = vmax.f32 %v1470, 0.0
        %v1551 = vmax.f32 %v1473, 0.0
        %v1552 = vmax.f32 %v1478, 0.0
        %v1553 = vmax.f32 %v1481, 0.0
        %v1554 = vmax.f32 %v1486, 0.0
        %v1555 = vmax.f32 %v1489, 0.0
        %v1556 = vld [vmem:[%s3] sm:$0xff]
        %v1557 = vld [vmem:[%s3 + $0x8] sm:$0xff]
        %v1558 = vld [vmem:[%s3 + $0x10] sm:$0xff]
        %v1559 = vld [vmem:[%s3 + $0x18] sm:$0xff]
        %v1560 = vld [vmem:[%s3 + $0x20] sm:$0xff]
        %v1561 = vld [vmem:[%s3 + $0x28] sm:$0xff]
        %v1562 = vld [vmem:[%s3 + $0x30] sm:$0xff]
        %v1563 = vld [vmem:[%s3 + $0x38] sm:$0xff]
        %v1564 = vld [vmem:[%s3 + $0x40] sm:$0xff]
        %v1565 = vld [vmem:[%s3 + $0x48] sm:$0xff]
        %v1566 = vld [vmem:[%s3 + $0x50] sm:$0xff]
        %v1567 = vld [vmem:[%s3 + $0x58] sm:$0xff]
        %v1568 = vld [vmem:[%s3 + $0x60] sm:$0xff]
        %v1569 = vld [vmem:[%s3 + $0x68] sm:$0xff]
        %v1570 = vld [vmem:[%s3 + $0x70] sm:$0xff]
        %v1571 = vld [vmem:[%s3 + $0x78] sm:$0xff]
        %v1572 = vld [vmem:[%s3 + $0x80] sm:$0xff]
        %v1573 = vld [vmem:[%s3 + $0x88] sm:$0xff]
        %v1574 = vld [vmem:[%s3 + $0x90] sm:$0xff]
        %v1575 = vld [vmem:[%s3 + $0x98] sm:$0xff]
        %v1576 = vld [vmem:[%s3 + $0xa0] sm:$0xff]
        %v1577 = vld [vmem:[%s3 + $0xa8] sm:$0xff]
        %v1578 = vld [vmem:[%s3 + $0xb0] sm:$0xff]
        %v1579 = vld [vmem:[%s3 + $0xb8] sm:$0xff]
        %v1580 = vld [vmem:[%s3 + $0xc0] sm:$0xff]
        %v1581 = vld [vmem:[%s3 + $0xc8] sm:$0xff]
        %v1582 = vld [vmem:[%s3 + $0xd0] sm:$0xff]
        %v1583 = vld [vmem:[%s3 + $0xd8] sm:$0xff]
        %v1584 = vld [vmem:[%s3 + $0xe0] sm:$0xff]
        %v1585 = vld [vmem:[%s3 + $0xe8] sm:$0xff]
        %v1586 = vld [vmem:[%s3 + $0xf0] sm:$0xff]
        %v1587 = vld [vmem:[%s3 + $0xf8] sm:$0xff]
        %v1588 = vpack.c.bf16 %v1493, %v1492
        %v1589 = vpack.c.bf16 %v1495, %v1494
        %v1590 = vpack.c.bf16 %v1497, %v1496
        %v1591 = vpack.c.bf16 %v1499, %v1498
        %v1592 = vpack.c.bf16 %v1501, %v1500
        %v1593 = vpack.c.bf16 %v1503, %v1502
        %v1594 = vpack.c.bf16 %v1505, %v1504
        %v1595 = vpack.c.bf16 %v1507, %v1506
        %v1596 = vpack.c.bf16 %v1509, %v1508
        %v1597 = vpack.c.bf16 %v1511, %v1510
        %v1598 = vpack.c.bf16 %v1513, %v1512
        %v1599 = vpack.c.bf16 %v1515, %v1514
        %v1600 = vpack.c.bf16 %v1517, %v1516
        %v1601 = vpack.c.bf16 %v1519, %v1518
        %v1602 = vpack.c.bf16 %v1521, %v1520
        %v1603 = vpack.c.bf16 %v1523, %v1522
        %v1604 = vpack.c.bf16 %v1525, %v1524
        %v1605 = vpack.c.bf16 %v1527, %v1526
        %v1606 = vpack.c.bf16 %v1529, %v1528
        %v1607 = vpack.c.bf16 %v1531, %v1530
        %v1608 = vpack.c.bf16 %v1533, %v1532
        %v1609 = vpack.c.bf16 %v1535, %v1534
        %v1610 = vpack.c.bf16 %v1537, %v1536
        %v1611 = vpack.c.bf16 %v1539, %v1538
        %v1612 = vpack.c.bf16 %v1541, %v1540
        %v1613 = vpack.c.bf16 %v1543, %v1542
        %v1614 = vpack.c.bf16 %v1545, %v1544
        %v1615 = vpack.c.bf16 %v1547, %v1546
        %v1616 = vpack.c.bf16 %v1549, %v1548
        %v1617 = vpack.c.bf16 %v1551, %v1550
        %v1618 = vpack.c.bf16 %v1553, %v1552
        %v1619 = vpack.c.bf16 %v1555, %v1554
        %v1620 = vld [vmem:[%s4] sm:$0xff]
        %v1621 = vld [vmem:[%s4 + $0x8] sm:$0xff]
        %v1622 = vld [vmem:[%s4 + $0x10] sm:$0xff]
        %v1623 = vld [vmem:[%s4 + $0x18] sm:$0xff]
        %v1624 = vld [vmem:[%s4 + $0x20] sm:$0xff]
        %v1625 = vld [vmem:[%s4 + $0x28] sm:$0xff]
        %v1626 = vld [vmem:[%s4 + $0x30] sm:$0xff]
        %v1627 = vld [vmem:[%s4 + $0x38] sm:$0xff]
        %v1628 = vld [vmem:[%s4 + $0x40] sm:$0xff]
        %v1629 = vld [vmem:[%s4 + $0x48] sm:$0xff]
        %v1630 = vld [vmem:[%s4 + $0x50] sm:$0xff]
        %v1631 = vld [vmem:[%s4 + $0x58] sm:$0xff]
        %v1632 = vld [vmem:[%s4 + $0x60] sm:$0xff]
        %v1633 = vld [vmem:[%s4 + $0x68] sm:$0xff]
        %v1634 = vld [vmem:[%s4 + $0x70] sm:$0xff]
        %v1635 = vld [vmem:[%s4 + $0x78] sm:$0xff]
        %1637 = vset.pattern.permute.xlu0 0
        %1638 = vperm.xlu0 %1637, %v1620
        %v1639 = vpop.permute.xlu0 %1638
        %1642 = vset.pattern.permute.xlu0 0
        %1643 = vperm.xlu0 %1642, %v1621
        %v1644 = vpop.permute.xlu0 %1643
        %1647 = vset.pattern.permute.xlu0 0
        %1648 = vperm.xlu0 %1647, %v1622
        %v1649 = vpop.permute.xlu0 %1648
        %1652 = vset.pattern.permute.xlu0 0
        %1653 = vperm.xlu0 %1652, %v1623
        %v1654 = vpop.permute.xlu0 %1653
        %1657 = vset.pattern.permute.xlu0 0
        %1658 = vperm.xlu0 %1657, %v1624
        %v1659 = vpop.permute.xlu0 %1658
        %1662 = vset.pattern.permute.xlu0 0
        %1663 = vperm.xlu0 %1662, %v1625
        %v1664 = vpop.permute.xlu0 %1663
        %1667 = vset.pattern.permute.xlu0 0
        %1668 = vperm.xlu0 %1667, %v1626
        %v1669 = vpop.permute.xlu0 %1668
        %1672 = vset.pattern.permute.xlu0 0
        %1673 = vperm.xlu0 %1672, %v1627
        %v1674 = vpop.permute.xlu0 %1673
        %1677 = vset.pattern.permute.xlu0 0
        %1678 = vperm.xlu0 %1677, %v1628
        %v1679 = vpop.permute.xlu0 %1678
        %1682 = vset.pattern.permute.xlu0 0
        %1683 = vperm.xlu0 %1682, %v1629
        %v1684 = vpop.permute.xlu0 %1683
        %1687 = vset.pattern.permute.xlu0 0
        %1688 = vperm.xlu0 %1687, %v1630
        %v1689 = vpop.permute.xlu0 %1688
        %1692 = vset.pattern.permute.xlu0 0
        %1693 = vperm.xlu0 %1692, %v1631
        %v1694 = vpop.permute.xlu0 %1693
        %1697 = vset.pattern.permute.xlu0 0
        %1698 = vperm.xlu0 %1697, %v1632
        %v1699 = vpop.permute.xlu0 %1698
        %1702 = vset.pattern.permute.xlu0 0
        %1703 = vperm.xlu0 %1702, %v1633
        %v1704 = vpop.permute.xlu0 %1703
        %1707 = vset.pattern.permute.xlu0 0
        %1708 = vperm.xlu0 %1707, %v1634
        %v1709 = vpop.permute.xlu0 %1708
        %1712 = vset.pattern.permute.xlu0 0
        %1713 = vperm.xlu0 %1712, %v1635
        %v1714 = vpop.permute.xlu0 %1713
        %v1748 = vunpack.c.l.b16 %v1556
        %v1749 = vunpack.c.h.b16 %v1556
        %v1750 = vunpack.c.l.b16 %v1557
        %v1751 = vunpack.c.h.b16 %v1557
        %v1752 = vunpack.c.l.b16 %v1558
        %v1753 = vunpack.c.h.b16 %v1558
        %v1754 = vunpack.c.l.b16 %v1559
        %v1755 = vunpack.c.h.b16 %v1559
        %v1756 = vunpack.c.l.b16 %v1560
        %v1757 = vunpack.c.h.b16 %v1560
        %v1758 = vunpack.c.l.b16 %v1561
        %v1759 = vunpack.c.h.b16 %v1561
        %v1760 = vunpack.c.l.b16 %v1562
        %v1761 = vunpack.c.h.b16 %v1562
        %v1762 = vunpack.c.l.b16 %v1563
        %v1763 = vunpack.c.h.b16 %v1563
        %v1764 = vunpack.c.l.b16 %v1564
        %v1765 = vunpack.c.h.b16 %v1564
        %v1766 = vunpack.c.l.b16 %v1565
        %v1767 = vunpack.c.h.b16 %v1565
        %v1768 = vunpack.c.l.b16 %v1566
        %v1769 = vunpack.c.h.b16 %v1566
        %v1770 = vunpack.c.l.b16 %v1567
        %v1771 = vunpack.c.h.b16 %v1567
        %v1772 = vunpack.c.l.b16 %v1568
        %v1773 = vunpack.c.h.b16 %v1568
        %v1774 = vunpack.c.l.b16 %v1569
        %v1775 = vunpack.c.h.b16 %v1569
        %v1776 = vunpack.c.l.b16 %v1570
        %v1777 = vunpack.c.h.b16 %v1570
        %v1778 = vunpack.c.l.b16 %v1571
        %v1779 = vunpack.c.h.b16 %v1571
        %v1780 = vunpack.c.l.b16 %v1572
        %v1781 = vunpack.c.h.b16 %v1572
        %v1782 = vunpack.c.l.b16 %v1573
        %v1783 = vunpack.c.h.b16 %v1573
        %v1784 = vunpack.c.l.b16 %v1574
        %v1785 = vunpack.c.h.b16 %v1574
        %v1786 = vunpack.c.l.b16 %v1575
        %v1787 = vunpack.c.h.b16 %v1575
        %v1788 = vunpack.c.l.b16 %v1576
        %v1789 = vunpack.c.h.b16 %v1576
        %v1790 = vunpack.c.l.b16 %v1577
        %v1791 = vunpack.c.h.b16 %v1577
        %v1792 = vunpack.c.l.b16 %v1578
        %v1793 = vunpack.c.h.b16 %v1578
        %v1794 = vunpack.c.l.b16 %v1579
        %v1795 = vunpack.c.h.b16 %v1579
        %v1796 = vunpack.c.l.b16 %v1580
        %v1797 = vunpack.c.h.b16 %v1580
        %v1798 = vunpack.c.l.b16 %v1581
        %v1799 = vunpack.c.h.b16 %v1581
        %v1800 = vunpack.c.l.b16 %v1582
        %v1801 = vunpack.c.h.b16 %v1582
        %v1802 = vunpack.c.l.b16 %v1583
        %v1803 = vunpack.c.h.b16 %v1583
        %v1804 = vunpack.c.l.b16 %v1584
        %v1805 = vunpack.c.h.b16 %v1584
        %v1806 = vunpack.c.l.b16 %v1585
        %v1807 = vunpack.c.h.b16 %v1585
        %v1808 = vunpack.c.l.b16 %v1586
        %v1809 = vunpack.c.h.b16 %v1586
        %v1810 = vunpack.c.l.b16 %v1587
        %v1811 = vunpack.c.h.b16 %v1587
        %v1812 = vpack.c.b16 %v1752, %v1748
        %v1813 = vpack.c.b16 %v1753, %v1749
        %v1814 = vpack.c.b16 %v1754, %v1750
        %v1815 = vpack.c.b16 %v1755, %v1751
        %v1816 = vpack.c.b16 %v1760, %v1756
        %v1817 = vpack.c.b16 %v1761, %v1757
        %v1818 = vpack.c.b16 %v1762, %v1758
        %v1819 = vpack.c.b16 %v1763, %v1759
        %v1820 = vpack.c.b16 %v1768, %v1764
        %v1821 = vpack.c.b16 %v1769, %v1765
        %v1822 = vpack.c.b16 %v1770, %v1766
        %v1823 = vpack.c.b16 %v1771, %v1767
        %v1824 = vpack.c.b16 %v1776, %v1772
        %v1825 = vpack.c.b16 %v1777, %v1773
        %v1826 = vpack.c.b16 %v1778, %v1774
        %v1827 = vpack.c.b16 %v1779, %v1775
        %v1828 = vpack.c.b16 %v1784, %v1780
        %v1829 = vpack.c.b16 %v1785, %v1781
        %v1830 = vpack.c.b16 %v1786, %v1782
        %v1831 = vpack.c.b16 %v1787, %v1783
        %v1832 = vpack.c.b16 %v1792, %v1788
        %v1833 = vpack.c.b16 %v1793, %v1789
        %v1834 = vpack.c.b16 %v1794, %v1790
        %v1835 = vpack.c.b16 %v1795, %v1791
        %v1836 = vpack.c.b16 %v1800, %v1796
        %v1837 = vpack.c.b16 %v1801, %v1797
        %v1838 = vpack.c.b16 %v1802, %v1798
        %v1839 = vpack.c.b16 %v1803, %v1799
        %v1840 = vpack.c.b16 %v1808, %v1804
        %v1841 = vpack.c.b16 %v1809, %v1805
        %v1842 = vpack.c.b16 %v1810, %v1806
        %v1843 = vpack.c.b16 %v1811, %v1807
        %1876 = vmatprep.subr.bf16.mxu0 0
        %1877 = vmatpush1.bf16.msra.mxu0 %v1588
        %1878 = vmatprep.subr.bf16.mxu0 0
        %1879 = vmatpush1.bf16.msra.mxu0 %v1589
        %1880 = vmatprep.subr.bf16.mxu0 0
        %1881 = vmatpush1.bf16.msra.mxu0 %v1590
        %1882 = vmatprep.subr.bf16.mxu0 0
        %1883 = vmatpush1.bf16.msra.mxu0 %v1591
        %1884 = vmatprep.subr.bf16.mxu0 0
        %1885 = vmatpush1.bf16.msra.mxu0 %v1592
        %1886 = vmatprep.subr.bf16.mxu0 0
        %1887 = vmatpush1.bf16.msra.mxu0 %v1593
        %1888 = vmatprep.subr.bf16.mxu0 0
        %1889 = vmatpush1.bf16.msra.mxu0 %v1594
        %1890 = vmatprep.subr.bf16.mxu0 0
        %1891 = vmatpush1.bf16.msra.mxu0 %v1595
        %1892 = vmatprep.subr.bf16.mxu0 0
        %1893 = vmatpush1.bf16.msra.mxu0 %v1596
        %1894 = vmatprep.subr.bf16.mxu0 0
        %1895 = vmatpush1.bf16.msra.mxu0 %v1597
        %1896 = vmatprep.subr.bf16.mxu0 0
        %1897 = vmatpush1.bf16.msra.mxu0 %v1598
        %1898 = vmatprep.subr.bf16.mxu0 0
        %1899 = vmatpush1.bf16.msra.mxu0 %v1599
        %1900 = vmatprep.subr.bf16.mxu0 0
        %1901 = vmatpush1.bf16.msra.mxu0 %v1600
        %1902 = vmatprep.subr.bf16.mxu0 0
        %1903 = vmatpush1.bf16.msra.mxu0 %v1601
        %1904 = vmatprep.subr.bf16.mxu0 0
        %1905 = vmatpush1.bf16.msra.mxu0 %v1602
        %1906 = vmatprep.subr.bf16.mxu0 0
        %1907 = vmatpush1.bf16.msra.mxu0 %v1603
        %1908 = vmatprep.mubr.bf16.mxu0 %v1813
        %1909 = vmatmul.mubr.bf16.gmra.mrb[0].mxu0 %v1812
        %v1910 = vpop.f32.mrb[0].mxu0
        %v1911 = vadd.f32 %v1639, %v1910
        %v1912 = vpop.f32.mrb[0].mxu0
        %v1913 = vpop.f32.mrb[0].mxu0
        %v1914 = vadd.f32 %v1644, %v1913
        %v1915 = vpop.f32.mrb[0].mxu0
        %1916 = vmatprep.mubr.bf16.mxu0 %v1817
        %1917 = vmatmul.mubr.bf16.gmra.mrb[0].mxu0 %v1816
        %v1918 = vpop.f32.mrb[0].mxu0
        %v1919 = vadd.f32 %v1649, %v1918
        %v1920 = vpop.f32.mrb[0].mxu0
        %v1921 = vpop.f32.mrb[0].mxu0
        %v1922 = vadd.f32 %v1654, %v1921
        %v1923 = vpop.f32.mrb[0].mxu0
        %1924 = vmatprep.mubr.bf16.mxu0 %v1821
        %1925 = vmatmul.mubr.bf16.gmra.mrb[0].mxu0 %v1820
        %v1926 = vpop.f32.mrb[0].mxu0
        %v1927 = vadd.f32 %v1659, %v1926
        %v1928 = vpop.f32.mrb[0].mxu0
        %v1929 = vpop.f32.mrb[0].mxu0
        %v1930 = vadd.f32 %v1664, %v1929
        %v1931 = vpop.f32.mrb[0].mxu0
        %1932 = vmatprep.mubr.bf16.mxu0 %v1825
        %1933 = vmatmul.mubr.bf16.gmra.mrb[0].mxu0 %v1824
        %v1934 = vpop.f32.mrb[0].mxu0
        %v1935 = vadd.f32 %v1669, %v1934
        %v1936 = vpop.f32.mrb[0].mxu0
        %v1937 = vpop.f32.mrb[0].mxu0
        %v1938 = vadd.f32 %v1674, %v1937
        %v1939 = vpop.f32.mrb[0].mxu0
        %1940 = vmatprep.mubr.bf16.mxu0 %v1829
        %1941 = vmatmul.mubr.bf16.gmra.mrb[0].mxu0 %v1828
        %v1942 = vpop.f32.mrb[0].mxu0
        %v1943 = vadd.f32 %v1679, %v1942
        %v1944 = vpop.f32.mrb[0].mxu0
        %v1945 = vpop.f32.mrb[0].mxu0
        %v1946 = vadd.f32 %v1684, %v1945
        %v1947 = vpop.f32.mrb[0].mxu0
        %1948 = vmatprep.mubr.bf16.mxu0 %v1833
        %1949 = vmatmul.mubr.bf16.gmra.mrb[0].mxu0 %v1832
        %v1950 = vpop.f32.mrb[0].mxu0
        %v1951 = vadd.f32 %v1689, %v1950
        %v1952 = vpop.f32.mrb[0].mxu0
        %v1953 = vpop.f32.mrb[0].mxu0
        %v1954 = vadd.f32 %v1694, %v1953
        %v1955 = vpop.f32.mrb[0].mxu0
        %1956 = vmatprep.mubr.bf16.mxu0 %v1837
        %1957 = vmatmul.mubr.bf16.gmra.mrb[0].mxu0 %v1836
        %v1958 = vpop.f32.mrb[0].mxu0
        %v1959 = vadd.f32 %v1699, %v1958
        %v1960 = vpop.f32.mrb[0].mxu0
        %v1961 = vpop.f32.mrb[0].mxu0
        %v1962 = vadd.f32 %v1704, %v1961
        %v1963 = vpop.f32.mrb[0].mxu0
        %1964 = vmatprep.mubr.bf16.mxu0 %v1841
        %1965 = vmatmul.mubr.bf16.gmra.mrb[0].mxu0 %v1840
        %v1966 = vpop.f32.mrb[0].mxu0
        %v1967 = vadd.f32 %v1709, %v1966
        %v1968 = vpop.f32.mrb[0].mxu0
        %v1969 = vpop.f32.mrb[0].mxu0
        %v1970 = vadd.f32 %v1714, %v1969
        %v1971 = vpop.f32.mrb[0].mxu0
        %1972 = vdwg.mxu0
        %1973 = vmatprep.subr.bf16.mxu0 0
        %1974 = vmatpush1.bf16.msra.mxu0 %v1604
        %1975 = vmatprep.subr.bf16.mxu0 0
        %1976 = vmatpush1.bf16.msra.mxu0 %v1605
        %1977 = vmatprep.subr.bf16.mxu0 0
        %1978 = vmatpush1.bf16.msra.mxu0 %v1606
        %1979 = vmatprep.subr.bf16.mxu0 0
        %1980 = vmatpush1.bf16.msra.mxu0 %v1607
        %1981 = vmatprep.subr.bf16.mxu0 0
        %1982 = vmatpush1.bf16.msra.mxu0 %v1608
        %1983 = vmatprep.subr.bf16.mxu0 0
        %1984 = vmatpush1.bf16.msra.mxu0 %v1609
        %1985 = vmatprep.subr.bf16.mxu0 0
        %1986 = vmatpush1.bf16.msra.mxu0 %v1610
        %1987 = vmatprep.subr.bf16.mxu0 0
        %1988 = vmatpush1.bf16.msra.mxu0 %v1611
        %1989 = vmatprep.subr.bf16.mxu0 0
        %1990 = vmatpush1.bf16.msra.mxu0 %v1612
        %1991 = vmatprep.subr.bf16.mxu0 0
        %1992 = vmatpush1.bf16.msra.mxu0 %v1613
        %1993 = vmatprep.subr.bf16.mxu0 0
        %1994 = vmatpush1.bf16.msra.mxu0 %v1614
        %1995 = vmatprep.subr.bf16.mxu0 0
        %1996 = vmatpush1.bf16.msra.mxu0 %v1615
        %1997 = vmatprep.subr.bf16.mxu0 0
        %1998 = vmatpush1.bf16.msra.mxu0 %v1616
        %1999 = vmatprep.subr.bf16.mxu0 0
        %2000 = vmatpush1.bf16.msra.mxu0 %v1617
        %2001 = vmatprep.subr.bf16.mxu0 0
        %2002 = vmatpush1.bf16.msra.mxu0 %v1618
        %2003 = vmatprep.subr.bf16.mxu0 0
        %2004 = vmatpush1.bf16.msra.mxu0 %v1619
        %2005 = vmatprep.mubr.bf16.mxu0 %v1815
        %2006 = vmatmul.mubr.bf16.gmra.mrb[0].mxu0 %v1814
        %v2007 = vpop.f32.mrb[0].mxu0
        %v2008 = vadd.f32 %v1911, %v2007
        %v2009 = vpop.f32.mrb[0].mxu0
        %v2010 = vpop.f32.mrb[0].mxu0
        %v2011 = vadd.f32 %v1914, %v2010
        %v2012 = vpop.f32.mrb[0].mxu0
        %2013 = vmatprep.mubr.bf16.mxu0 %v1819
        %2014 = vmatmul.mubr.bf16.gmra.mrb[0].mxu0 %v1818
        %v2015 = vpop.f32.mrb[0].mxu0
        %v2016 = vadd.f32 %v1919, %v2015
        %v2017 = vpop.f32.mrb[0].mxu0
        %v2018 = vpop.f32.mrb[0].mxu0
        %v2019 = vadd.f32 %v1922, %v2018
        %v2020 = vpop.f32.mrb[0].mxu0
        %2021 = vmatprep.mubr.bf16.mxu0 %v1823
        %2022 = vmatmul.mubr.bf16.gmra.mrb[0].mxu0 %v1822
        %v2023 = vpop.f32.mrb[0].mxu0
        %v2024 = vadd.f32 %v1927, %v2023
        %v2025 = vpop.f32.mrb[0].mxu0
        %v2026 = vpop.f32.mrb[0].mxu0
        %v2027 = vadd.f32 %v1930, %v2026
        %v2028 = vpop.f32.mrb[0].mxu0
        %2029 = vmatprep.mubr.bf16.mxu0 %v1827
        %2030 = vmatmul.mubr.bf16.gmra.mrb[0].mxu0 %v1826
        %v2031 = vpop.f32.mrb[0].mxu0
        %v2032 = vadd.f32 %v1935, %v2031
        %v2033 = vpop.f32.mrb[0].mxu0
        %v2034 = vpop.f32.mrb[0].mxu0
        %v2035 = vadd.f32 %v1938, %v2034
        %v2036 = vpop.f32.mrb[0].mxu0
        %2037 = vmatprep.mubr.bf16.mxu0 %v1831
        %2038 = vmatmul.mubr.bf16.gmra.mrb[0].mxu0 %v1830
        %v2039 = vpop.f32.mrb[0].mxu0
        %v2040 = vadd.f32 %v1943, %v2039
        %v2041 = vpop.f32.mrb[0].mxu0
        %v2042 = vpop.f32.mrb[0].mxu0
        %v2043 = vadd.f32 %v1946, %v2042
        %v2044 = vpop.f32.mrb[0].mxu0
        %2045 = vmatprep.mubr.bf16.mxu0 %v1835
        %2046 = vmatmul.mubr.bf16.gmra.mrb[0].mxu0 %v1834
        %v2047 = vpop.f32.mrb[0].mxu0
        %v2048 = vadd.f32 %v1951, %v2047
        %v2049 = vpop.f32.mrb[0].mxu0
        %v2050 = vpop.f32.mrb[0].mxu0
        %v2051 = vadd.f32 %v1954, %v2050
        %v2052 = vpop.f32.mrb[0].mxu0
        %2053 = vmatprep.mubr.bf16.mxu0 %v1839
        %2054 = vmatmul.mubr.bf16.gmra.mrb[0].mxu0 %v1838
        %v2055 = vpop.f32.mrb[0].mxu0
        %v2056 = vadd.f32 %v1959, %v2055
        %v2057 = vpop.f32.mrb[0].mxu0
        %v2058 = vpop.f32.mrb[0].mxu0
        %v2059 = vadd.f32 %v1962, %v2058
        %v2060 = vpop.f32.mrb[0].mxu0
        %2061 = vmatprep.mubr.bf16.mxu0 %v1843
        %2062 = vmatmul.mubr.bf16.gmra.mrb[0].mxu0 %v1842
        %v2063 = vpop.f32.mrb[0].mxu0
        %v2064 = vadd.f32 %v1967, %v2063
        %v2065 = vpop.f32.mrb[0].mxu0
        %v2066 = vpop.f32.mrb[0].mxu0
        %v2067 = vadd.f32 %v1970, %v2066
        %v2068 = vpop.f32.mrb[0].mxu0
        %2069 = vdwg.mxu0
        %v2070 = vmax.f32 %v2008, 0.0
        %v2071 = vmax.f32 %v2011, 0.0
        %v2072 = vmax.f32 %v2016, 0.0
        %v2073 = vmax.f32 %v2019, 0.0
        %v2074 = vmax.f32 %v2024, 0.0
        %v2075 = vmax.f32 %v2027, 0.0
        %v2076 = vmax.f32 %v2032, 0.0
        %v2077 = vmax.f32 %v2035, 0.0
        %v2078 = vmax.f32 %v2040, 0.0
        %v2079 = vmax.f32 %v2043, 0.0
        %v2080 = vmax.f32 %v2048, 0.0
        %v2081 = vmax.f32 %v2051, 0.0
        %v2082 = vmax.f32 %v2056, 0.0
        %v2083 = vmax.f32 %v2059, 0.0
        %v2084 = vmax.f32 %v2064, 0.0
        %v2085 = vmax.f32 %v2067, 0.0
        %v2086 = vld [vmem:[#allocation5] sm:$0xf]
        %v2087 = vld [vmem:[#allocation5 + $0x4] sm:$0xf]
        %v2088 = vld [vmem:[#allocation5 + $0x8] sm:$0xf]
        %v2089 = vld [vmem:[#allocation5 + $0xc] sm:$0xf]
        %v2090 = vld [vmem:[#allocation5 + $0x10] sm:$0xf]
        %v2091 = vld [vmem:[#allocation5 + $0x14] sm:$0xf]
        %v2092 = vld [vmem:[#allocation5 + $0x18] sm:$0xf]
        %v2093 = vld [vmem:[#allocation5 + $0x1c] sm:$0xf]
        %v2094 = vld [vmem:[#allocation5 + $0x20] sm:$0xf]
        %v2095 = vld [vmem:[#allocation5 + $0x24] sm:$0xf]
        %v2096 = vld [vmem:[#allocation5 + $0x28] sm:$0xf]
        %v2097 = vld [vmem:[#allocation5 + $0x2c] sm:$0xf]
        %v2098 = vld [vmem:[#allocation5 + $0x30] sm:$0xf]
        %v2099 = vld [vmem:[#allocation5 + $0x34] sm:$0xf]
        %v2100 = vld [vmem:[#allocation5 + $0x38] sm:$0xf]
        %v2101 = vld [vmem:[#allocation5 + $0x3c] sm:$0xf]
        %v2102 = vpack.c.bf16 %v2071, %v2070
        %v2103 = vpack.c.bf16 %v2073, %v2072
        %v2104 = vpack.c.bf16 %v2075, %v2074
        %v2105 = vpack.c.bf16 %v2077, %v2076
        %v2106 = vpack.c.bf16 %v2079, %v2078
        %v2107 = vpack.c.bf16 %v2081, %v2080
        %v2108 = vpack.c.bf16 %v2083, %v2082
        %v2109 = vpack.c.bf16 %v2085, %v2084
        %v2110 = vld [vmem:[%s6] sm:$0xff]
        %v2111 = vld [vmem:[%s6 + $0x8] sm:$0xff]
        %v2112 = vld [vmem:[%s6 + $0x10] sm:$0xff]
        %v2113 = vld [vmem:[%s6 + $0x18] sm:$0xff]
        %v2114 = vld [vmem:[%s6 + $0x20] sm:$0xff]
        %v2115 = vld [vmem:[%s6 + $0x28] sm:$0xff]
        %v2116 = vld [vmem:[%s6 + $0x30] sm:$0xff]
        %v2117 = vld [vmem:[%s6 + $0x38] sm:$0xff]
        %v2118 = vld [vmem:[%s6 + $0x40] sm:$0xff]
        %v2119 = vld [vmem:[%s6 + $0x48] sm:$0xff]
        %v2120 = vld [vmem:[%s6 + $0x50] sm:$0xff]
        %v2121 = vld [vmem:[%s6 + $0x58] sm:$0xff]
        %v2122 = vld [vmem:[%s6 + $0x60] sm:$0xff]
        %v2123 = vld [vmem:[%s6 + $0x68] sm:$0xff]
        %v2124 = vld [vmem:[%s6 + $0x70] sm:$0xff]
        %v2125 = vld [vmem:[%s6 + $0x78] sm:$0xff]
        %2127 = vset.pattern.permute.xlu0 0
        %2128 = vperm.xlu0 %2127, %v2110
        %v2129 = vpop.permute.xlu0 %2128
        %2132 = vset.pattern.permute.xlu0 0
        %2133 = vperm.xlu0 %2132, %v2111
        %v2134 = vpop.permute.xlu0 %2133
        %2137 = vset.pattern.permute.xlu0 0
        %2138 = vperm.xlu0 %2137, %v2112
        %v2139 = vpop.permute.xlu0 %2138
        %2142 = vset.pattern.permute.xlu0 0
        %2143 = vperm.xlu0 %2142, %v2113
        %v2144 = vpop.permute.xlu0 %2143
        %2147 = vset.pattern.permute.xlu0 0
        %2148 = vperm.xlu0 %2147, %v2114
        %v2149 = vpop.permute.xlu0 %2148
        %2152 = vset.pattern.permute.xlu0 0
        %2153 = vperm.xlu0 %2152, %v2115
        %v2154 = vpop.permute.xlu0 %2153
        %2157 = vset.pattern.permute.xlu0 0
        %2158 = vperm.xlu0 %2157, %v2116
        %v2159 = vpop.permute.xlu0 %2158
        %2162 = vset.pattern.permute.xlu0 0
        %2163 = vperm.xlu0 %2162, %v2117
        %v2164 = vpop.permute.xlu0 %2163
        %2167 = vset.pattern.permute.xlu0 0
        %2168 = vperm.xlu0 %2167, %v2118
        %v2169 = vpop.permute.xlu0 %2168
        %2172 = vset.pattern.permute.xlu0 0
        %2173 = vperm.xlu0 %2172, %v2119
        %v2174 = vpop.permute.xlu0 %2173
        %2177 = vset.pattern.permute.xlu0 0
        %2178 = vperm.xlu0 %2177, %v2120
        %v2179 = vpop.permute.xlu0 %2178
        %2182 = vset.pattern.permute.xlu0 0
        %2183 = vperm.xlu0 %2182, %v2121
        %v2184 = vpop.permute.xlu0 %2183
        %2187 = vset.pattern.permute.xlu0 0
        %2188 = vperm.xlu0 %2187, %v2122
        %v2189 = vpop.permute.xlu0 %2188
        %2192 = vset.pattern.permute.xlu0 0
        %2193 = vperm.xlu0 %2192, %v2123
        %v2194 = vpop.permute.xlu0 %2193
        %2197 = vset.pattern.permute.xlu0 0
        %2198 = vperm.xlu0 %2197, %v2124
        %v2199 = vpop.permute.xlu0 %2198
        %2202 = vset.pattern.permute.xlu0 0
        %2203 = vperm.xlu0 %2202, %v2125
        %v2204 = vpop.permute.xlu0 %2203
        %v2222 = vunpack.c.l.b16 %v2086
        %v2223 = vunpack.c.l.b16 %v2087
        %v2224 = vunpack.c.l.b16 %v2088
        %v2225 = vunpack.c.l.b16 %v2089
        %v2226 = vunpack.c.l.b16 %v2090
        %v2227 = vunpack.c.l.b16 %v2091
        %v2228 = vunpack.c.l.b16 %v2092
        %v2229 = vunpack.c.l.b16 %v2093
        %v2230 = vunpack.c.l.b16 %v2094
        %v2231 = vunpack.c.l.b16 %v2095
        %v2232 = vunpack.c.l.b16 %v2096
        %v2233 = vunpack.c.l.b16 %v2097
        %v2234 = vunpack.c.l.b16 %v2098
        %v2235 = vunpack.c.l.b16 %v2099
        %v2236 = vunpack.c.l.b16 %v2100
        %v2237 = vunpack.c.l.b16 %v2101
        %v2238 = vpack.c.b16 %v2223, %v2222
        %v2239 = vpack.c.b16 %v2225, %v2224
        %v2240 = vpack.c.b16 %v2227, %v2226
        %v2241 = vpack.c.b16 %v2229, %v2228
        %v2242 = vpack.c.b16 %v2231, %v2230
        %v2243 = vpack.c.b16 %v2233, %v2232
        %v2244 = vpack.c.b16 %v2235, %v2234
        %v2245 = vpack.c.b16 %v2237, %v2236
        %2254 = vmatprep.subr.bf16.mxu0 0
        %2255 = vmatpush1.bf16.msra.mxu0 %v2102
        %2256 = vmatprep.subr.bf16.mxu0 0
        %2257 = vmatpush1.bf16.msra.mxu0 %v2103
        %2258 = vmatprep.subr.bf16.mxu0 0
        %2259 = vmatpush1.bf16.msra.mxu0 %v2104
        %2260 = vmatprep.subr.bf16.mxu0 0
        %2261 = vmatpush1.bf16.msra.mxu0 %v2105
        %2262 = vmatprep.subr.bf16.mxu0 0
        %2263 = vmatpush1.bf16.msra.mxu0 %v2106
        %2264 = vmatprep.subr.bf16.mxu0 0
        %2265 = vmatpush1.bf16.msra.mxu0 %v2107
        %2266 = vmatprep.subr.bf16.mxu0 0
        %2267 = vmatpush1.bf16.msra.mxu0 %v2108
        %2268 = vmatprep.subr.bf16.mxu0 0
        %2269 = vmatpush1.bf16.msra.mxu0 %v2109
        %2270 = vmatprep.subr.bf16.mxu0 0
        %2271 = vmatpush1.bf16.msra.mxu0 0
        %2272 = vmatprep.subr.bf16.mxu0 0
        %2273 = vmatpush1.bf16.msra.mxu0 0
        %2274 = vmatprep.subr.bf16.mxu0 0
        %2275 = vmatpush1.bf16.msra.mxu0 0
        %2276 = vmatprep.subr.bf16.mxu0 0
        %2277 = vmatpush1.bf16.msra.mxu0 0
        %2278 = vmatprep.subr.bf16.mxu0 0
        %2279 = vmatpush1.bf16.msra.mxu0 0
        %2280 = vmatprep.subr.bf16.mxu0 0
        %2281 = vmatpush1.bf16.msra.mxu0 0
        %2282 = vmatprep.subr.bf16.mxu0 0
        %2283 = vmatpush1.bf16.msra.mxu0 0
        %2284 = vmatprep.subr.bf16.mxu0 0
        %2285 = vmatpush1.bf16.msra.mxu0 0
        %2286 = vmatprep.mubr.bf16.mxu0 0
        %2287 = vmatmul.mubr.bf16.gmra.mrb[0].mxu0 %v2238
        %v2288 = vpop.f32.mrb[0].mxu0
        %v2289 = vadd.f32 %v2129, %v2288
        %v2290 = vpop.f32.mrb[0].mxu0
        %v2291 = vpop.f32.mrb[0].mxu0
        %v2292 = vadd.f32 %v2134, %v2291
        %v2293 = vpop.f32.mrb[0].mxu0
        %2294 = vmatprep.mubr.bf16.mxu0 0
        %2295 = vmatmul.mubr.bf16.gmra.mrb[0].mxu0 %v2239
        %v2296 = vpop.f32.mrb[0].mxu0
        %v2297 = vadd.f32 %v2139, %v2296
        %v2298 = vpop.f32.mrb[0].mxu0
        %v2299 = vpop.f32.mrb[0].mxu0
        %v2300 = vadd.f32 %v2144, %v2299
        %v2301 = vpop.f32.mrb[0].mxu0
        %2302 = vmatprep.mubr.bf16.mxu0 0
        %2303 = vmatmul.mubr.bf16.gmra.mrb[0].mxu0 %v2240
        %v2304 = vpop.f32.mrb[0].mxu0
        %v2305 = vadd.f32 %v2149, %v2304
        %v2306 = vpop.f32.mrb[0].mxu0
        %v2307 = vpop.f32.mrb[0].mxu0
        %v2308 = vadd.f32 %v2154, %v2307
        %v2309 = vpop.f32.mrb[0].mxu0
        %2310 = vmatprep.mubr.bf16.mxu0 0
        %2311 = vmatmul.mubr.bf16.gmra.mrb[0].mxu0 %v2241
        %v2312 = vpop.f32.mrb[0].mxu0
        %v2313 = vadd.f32 %v2159, %v2312
        %v2314 = vpop.f32.mrb[0].mxu0
        %v2315 = vpop.f32.mrb[0].mxu0
        %v2316 = vadd.f32 %v2164, %v2315
        %v2317 = vpop.f32.mrb[0].mxu0
        %2318 = vmatprep.mubr.bf16.mxu0 0
        %2319 = vmatmul.mubr.bf16.gmra.mrb[0].mxu0 %v2242
        %v2320 = vpop.f32.mrb[0].mxu0
        %v2321 = vadd.f32 %v2169, %v2320
        %v2322 = vpop.f32.mrb[0].mxu0
        %v2323 = vpop.f32.mrb[0].mxu0
        %v2324 = vadd.f32 %v2174, %v2323
        %v2325 = vpop.f32.mrb[0].mxu0
        %2326 = vmatprep.mubr.bf16.mxu0 0
        %2327 = vmatmul.mubr.bf16.gmra.mrb[0].mxu0 %v2243
        %v2328 = vpop.f32.mrb[0].mxu0
        %v2329 = vadd.f32 %v2179, %v2328
        %v2330 = vpop.f32.mrb[0].mxu0
        %v2331 = vpop.f32.mrb[0].mxu0
        %v2332 = vadd.f32 %v2184, %v2331
        %v2333 = vpop.f32.mrb[0].mxu0
        %2334 = vmatprep.mubr.bf16.mxu0 0
        %2335 = vmatmul.mubr.bf16.gmra.mrb[0].mxu0 %v2244
        %v2336 = vpop.f32.mrb[0].mxu0
        %v2337 = vadd.f32 %v2189, %v2336
        %v2338 = vpop.f32.mrb[0].mxu0
        %v2339 = vpop.f32.mrb[0].mxu0
        %v2340 = vadd.f32 %v2194, %v2339
        %v2341 = vpop.f32.mrb[0].mxu0
        %2342 = vmatprep.mubr.bf16.mxu0 0
        %2343 = vmatmul.mubr.bf16.gmra.mrb[0].mxu0 %v2245
        %v2344 = vpop.f32.mrb[0].mxu0
        %v2345 = vadd.f32 %v2199, %v2344
        %v2346 = vpop.f32.mrb[0].mxu0
        %v2347 = vpop.f32.mrb[0].mxu0
        %v2348 = vadd.f32 %v2204, %v2347
        %v2349 = vpop.f32.mrb[0].mxu0
        %2350 = vdwg.mxu0
        %v2351 = vmax.f32 %v2289, 0.0
        %v2352 = vmax.f32 %v2292, 0.0
        %v2353 = vmax.f32 %v2297, 0.0
        %v2354 = vmax.f32 %v2300, 0.0
        %v2355 = vmax.f32 %v2305, 0.0
        %v2356 = vmax.f32 %v2308, 0.0
        %v2357 = vmax.f32 %v2313, 0.0
        %v2358 = vmax.f32 %v2316, 0.0
        %v2359 = vmax.f32 %v2321, 0.0
        %v2360 = vmax.f32 %v2324, 0.0
        %v2361 = vmax.f32 %v2329, 0.0
        %v2362 = vmax.f32 %v2332, 0.0
        %v2363 = vmax.f32 %v2337, 0.0
        %v2364 = vmax.f32 %v2340, 0.0
        %v2365 = vmax.f32 %v2345, 0.0
        %v2366 = vmax.f32 %v2348, 0.0
        %v2367 = vld [vmem:[%s7] sm:$0xf]
        %v2368 = vpack.c.bf16 %v2352, %v2351
        %v2369 = vpack.c.bf16 %v2354, %v2353
        %v2370 = vpack.c.bf16 %v2356, %v2355
        %v2371 = vpack.c.bf16 %v2358, %v2357
        %v2372 = vpack.c.bf16 %v2360, %v2359
        %v2373 = vpack.c.bf16 %v2362, %v2361
        %v2374 = vpack.c.bf16 %v2364, %v2363
        %v2375 = vpack.c.bf16 %v2366, %v2365
        %v2376 = vld [vmem:[%s8] sm:$0xff]
        %2378 = vset.pattern.permute.xlu0 0
        %2379 = vperm.xlu0 %2378, %v2376
        %v2380 = vpop.permute.xlu0 %2379
        %2382 = vmatprep.subr.bf16.mxu0 0
        %2383 = vmatpush1.bf16.msra.mxu0 %v2368
        %2384 = vmatprep.subr.bf16.mxu0 0
        %2385 = vmatpush1.bf16.msra.mxu0 %v2369
        %2386 = vmatprep.subr.bf16.mxu0 0
        %2387 = vmatpush1.bf16.msra.mxu0 %v2370
        %2388 = vmatprep.subr.bf16.mxu0 0
        %2389 = vmatpush1.bf16.msra.mxu0 %v2371
        %2390 = vmatprep.subr.bf16.mxu0 0
        %2391 = vmatpush1.bf16.msra.mxu0 %v2372
        %2392 = vmatprep.subr.bf16.mxu0 0
        %2393 = vmatpush1.bf16.msra.mxu0 %v2373
        %2394 = vmatprep.subr.bf16.mxu0 0
        %2395 = vmatpush1.bf16.msra.mxu0 %v2374
        %2396 = vmatprep.subr.bf16.mxu0 0
        %2397 = vmatpush1.bf16.msra.mxu0 %v2375
        %2398 = vmatprep.subr.bf16.mxu0 0
        %2399 = vmatpush1.bf16.msra.mxu0 0
        %2400 = vmatprep.subr.bf16.mxu0 0
        %2401 = vmatpush1.bf16.msra.mxu0 0
        %2402 = vmatprep.subr.bf16.mxu0 0
        %2403 = vmatpush1.bf16.msra.mxu0 0
        %2404 = vmatprep.subr.bf16.mxu0 0
        %2405 = vmatpush1.bf16.msra.mxu0 0
        %2406 = vmatprep.subr.bf16.mxu0 0
        %2407 = vmatpush1.bf16.msra.mxu0 0
        %2408 = vmatprep.subr.bf16.mxu0 0
        %2409 = vmatpush1.bf16.msra.mxu0 0
        %2410 = vmatprep.subr.bf16.mxu0 0
        %2411 = vmatpush1.bf16.msra.mxu0 0
        %2412 = vmatprep.subr.bf16.mxu0 0
        %2413 = vmatpush1.bf16.msra.mxu0 0
        %2414 = vmatprep.mubr.bf16.mxu0 0
        %2415 = vmatmul.mubr.bf16.gmra.mrb[0].mxu0 %v2367
        %v2416 = vpop.f32.mrb[0].mxu0
        %v2417 = vadd.f32 %v2380, %v2416
        %v2418 = vpop.f32.mrb[0].mxu0
        %v2419 = vpop.f32.mrb[0].mxu0
        %v2420 = vpop.f32.mrb[0].mxu0
        %2421 = vdwg.mxu0
        %v2422 = vrot.slane %v2417, 4
        %v2423 = vmax.f32 %v2417, %v2422
        %v2424 = vrot.slane %v2423, 2
        %v2425 = vmax.f32 %v2423, %v2424
        %v2426 = vrot.slane %v2425, 1
        %v2427 = vmax.f32 %v2425, %v2426
        %v2428 = vsub.f32 %v2417, %v2427
        %v2429 = vmul.f32 %v2428, 1.442695
        %v2430 = vpow.pop %v2429
        %v2431 = vrot.slane %v2430, 4
        %v2432 = vadd.f32 %v2430, %v2431
        %v2433 = vrot.slane %v2432, 2
        %v2434 = vadd.f32 %v2432, %v2433
        %v2435 = vrot.slane %v2434, 1
        %v2436 = vadd.f32 %v2434, %v2435
        %v2437 = vrcp.pop %v2436
        %v2438 = vmul.f32 %v2430, %v2437
        %2439 = vst [vmem:[%s377] sm:$0xff] %v2438
        %s2440 = sand.u32 %s243, 1
        %s2441 = scalar_lea.sflag [#allocation4], %s2440
        %s2442 = sand.u32 %s243, 1
        %s2443 = smul.addr %s2442, 8
        %s2444 = scalar_lea.vmem [#allocation7], %s2443
        // Predicated region
        $region65: #{tpu_custom_call.1} parent=55 // pred_check
          %p2445 = pneg %p253
        $region66: #{tpu_custom_call.1} parent=55 // pred_check_branch
          %2447 = sbr.rel (%p2445) target = $region68
        $region67: #{tpu_custom_call.1} parent=55 // pred_region
          %s2449 = ssub.s32 128, 128
          %2450 = vsyncadd %s2441, %s2449
          %s2451 = sadd.s32 %s30, %s29
          %s2452 = smul.addr %s2451, 128
          %s2453 = scalar_lea.hbm %s9, %s2452
          %s2455 = sshll.u32 %s2444, 4
          %s2456 = int_to_ptr.vmem [resolvable:$true] %s2455
          %2458 = dma.vmem_to_hbm [thread:$0]  %s2456, 128, %s2453, %s2441
        $region68: #{tpu_custom_call.1} parent=55 // pred_fallthru
          _
      $region56: #{tpu_custom_call.1} parent=5 // pred_fallthru
        _
      %p2459 = scmp.le.s32.totalorder 2, %s20
      // Predicated region
      $region69: #{tpu_custom_call.1} parent=5 // pred_check
        %p2460 = pneg %p2459
      $region70: #{tpu_custom_call.1} parent=5 // pred_check_branch
        %2462 = sbr.rel (%p2460) target = $region72
      $region71: #{tpu_custom_call.1} parent=5 // pred_region
        %s2463 = ssub.s32 %s20, 2
        // Predicated region
        $region73: #{tpu_custom_call.1} parent=71 // pred_check
          %p2464 = pneg %p259
        $region74: #{tpu_custom_call.1} parent=71 // pred_check_branch
          %2466 = sbr.rel (%p2464) target = $region76
        $region75: #{tpu_custom_call.1} parent=71 // pred_region
          %s2467 = sand.u32 %s244, 1
          %s2468 = scalar_lea.sflag [#allocation4], %s2467
          %s2469 = sand.u32 %s244, 1
          %s2470 = smul.addr %s2469, 8
          %s2471 = scalar_lea.vmem [#allocation7], %s2470
          %2472 = dma.done %s2468, 128
        $region76: #{tpu_custom_call.1} parent=71 // pred_fallthru
          _
      $region72: #{tpu_custom_call.1} parent=5 // pred_fallthru
        _
    $region6: #{tpu_custom_call.1} parent=1 // loop_footer
      %s24 = sadd.s32 1, %s20
    $region7: #{tpu_custom_call.1} parent=1 // loop_footer_branch
      %19 = sbr.rel target = $region3
    $region8: #{tpu_custom_call.1} parent=1 // loop_exit
      _
    %2473 = vsyncpa [#allocation3], 1
    %s2474 = scalar_lea.sflag [#allocation3], 1
    %2475 = vsyncpa %s2474, 1
    %2476 = vsyncpa [#allocation6], 1
    %2477 = vsyncpa [#allocation4], 1
    %s2478 = scalar_lea.sflag [#allocation4], 1
    %2479 = vsyncpa %s2478, 1

</llo_original>
